<compile_context>
chip_gen: v7x
topology: tpu7x:2x2x1
jax: 0.10.0
libtpu: 0.0.40
codegen_flags: <defaults>
</compile_context>

<pallas_src>
import functools
from typing import NamedTuple

import jax
import jax.numpy as jnp
from jax.experimental import pallas as pl
from jax.experimental.pallas import tpu as pltpu


# ---------------------------------------------------------------------------
# Helpers
# ---------------------------------------------------------------------------

def _round_up(n, m):
    return ((n + m - 1) // m) * m


def _leaky_relu(x, slope=0.01):
    # nn.LeakyReLU() default negative_slope = 0.01
    return jnp.where(x > 0, x, slope * x)


def _probe_buffered():
    """Decide ONCE (at import) whether pl.Buffered / pipeline_mode exists."""
    try:
        pl.BlockSpec((8, 128), lambda i: (0, 0), pipeline_mode=pl.Buffered(1))
        return True
    except Exception:
        return False


_HAS_BUFFERED = _probe_buffered()


def _device_vmem_bytes():
    """Per-core VMEM capacity; conservative 64 MiB fallback (v7x-safe)."""
    try:
        info = pltpu.get_tpu_info()
        cap = getattr(info, "vmem_capacity_bytes", None)
        if cap:
            return int(cap)
    except Exception:
        pass
    return 64 << 20


# ---------------------------------------------------------------------------
# Kernels
# ---------------------------------------------------------------------------

def _encoder_kernel_resident(
    x_ref,                       # (TB, Dpad)  bf16
    w1_ref, b1_ref,              # (Dpad, 1024) bf16 / (1, 1024) f32
    w2_ref, b2_ref,              # (1024, 512)  bf16 / (1, 512)  f32
    w3_ref, b3_ref,              # (512, 256)   bf16 / (1, 256)  f32
    wh_ref, bh_ref,              # (256, Lpad)  bf16 / (1, Lpad) f32  (merged heads)
    out_ref,                     # (TB, Lpad)   f32
):
    # Layer 1 (BN + bias folded) -> LeakyReLU.  Dropout == identity in eval.
    # fc1 dot feeds the epilogue directly: no accumulator scratch round-trip.
    h = _leaky_relu(
        jnp.dot(x_ref[...], w1_ref[...], preferred_element_type=jnp.float32)
        + b1_ref[...]).astype(jnp.bfloat16)
    # Layer 2
    h = _leaky_relu(
        jnp.dot(h, w2_ref[...], preferred_element_type=jnp.float32)
        + b2_ref[...]).astype(jnp.bfloat16)
    # Layer 3
    h = _leaky_relu(
        jnp.dot(h, w3_ref[...], preferred_element_type=jnp.float32)
        + b3_ref[...]).astype(jnp.bfloat16)
    # Merged [mean | log_var] head, lane-dense store.
    out_ref[...] = (
        jnp.dot(h, wh_ref[...], preferred_element_type=jnp.float32)
        + bh_ref[...]
    )


def _encoder_kernel_streamed(
    x_ref,                       # (TB, TK)     bf16
    w1_ref, b1_ref,              # (TK, 1024)   bf16 / (1, 1024) f32
    w2_ref, b2_ref,              # (1024, 512)  bf16 / (1, 512)  f32
    w3_ref, b3_ref,              # (512, 256)   bf16 / (1, 256)  f32
    wh_ref, bh_ref,              # (256, Lpad)  bf16 / (1, Lpad) f32
    out_ref,                     # (TB, Lpad)   f32
    acc_ref,                     # (TB, 1024)   f32 scratch (fc1 accumulator)
):
    k = pl.program_id(1)

    @pl.when(k == 0)
    def _init():
        acc_ref[...] = jnp.zeros_like(acc_ref)

    # fc1 partial product over the input-feature (K) axis.
    acc_ref[...] += jnp.dot(x_ref[...], w1_ref[...],
                            preferred_element_type=jnp.float32)

    @pl.when(k == pl.num_programs(1) - 1)
    def _finish():
        h = _leaky_relu(acc_ref[...] + b1_ref[...]).astype(jnp.bfloat16)
        h = _leaky_relu(
            jnp.dot(h, w2_ref[...], preferred_element_type=jnp.float32)
            + b2_ref[...]).astype(jnp.bfloat16)
        h = _leaky_relu(
            jnp.dot(h, w3_ref[...], preferred_element_type=jnp.float32)
            + b3_ref[...]).astype(jnp.bfloat16)
        out_ref[...] = (
            jnp.dot(h, wh_ref[...], preferred_element_type=jnp.float32)
            + bh_ref[...]
        )


# ---------------------------------------------------------------------------
# Parameter preprocessing (one-time, hoisted out of the hot path)
# ---------------------------------------------------------------------------

class EncoderConfig(NamedTuple):
    input_dim: int
    latent_dim: int
    d_pad: int           # padded fc1 input-feature dim (w1 is pre-padded)
    l_pad: int           # padded merged-head width (>=128, lane-dense)
    use_resident: bool   # fc1 weight fully resident in VMEM (no K grid axis)
    k_tile: int          # K tile when streaming fc1
    batch_tile: int      # preferred batch tile
    single_buffer: bool  # pl.Buffered available (single-buffer resident weights)
    vmem_cap: int        # per-core VMEM capacity (bytes)


def _fold_bn_into_linear(w, b, gamma, beta, mean, var, eps=1e-5):
    """Return (W', b') such that x@W' + b' == BN_eval(x@W + b)."""
    scale = gamma * jax.lax.rsqrt(var + eps)           # (1, out)
    shift = beta - mean * scale                        # (1, out)
    w_f = (w * scale).astype(jnp.bfloat16)
    b_f = (b * scale + shift).astype(jnp.float32)
    return w_f, b_f


def prepare_encoder_params(params, latent_dim, *, k_tile=1024, batch_tile=512,
                           eps=1e-5):
    """Fold BN, merge heads, pad, cast — once.  Returns (prep_arrays, cfg)."""
    input_dim = int(params["fc1_w"].shape[0])
    L = int(latent_dim)

    vmem_cap = _device_vmem_bytes()
    single_buffer = _HAS_BUFFERED

    # Generation-aware resident threshold for the bf16 fc1 weight:
    #   128 MiB VMEM (v5e/v6e)  -> 48 MiB resident cap
    #    64 MiB VMEM (v7x)      -> 24 MiB resident cap
    resident_cap = min(48 << 20, (vmem_cap * 3) // 8)
    if not single_buffer:
        resident_cap //= 2       # w1 would be double-buffered in that case
    w1_bytes = _round_up(input_dim, 128) * 1024 * 2
    use_resident = w1_bytes <= resident_cap

    d_pad = (_round_up(input_dim, 128) if use_resident
             else _round_up(input_dim, k_tile))

    w1, b1 = _fold_bn_into_linear(params["fc1_w"], params["fc1_b"],
                                  params["bn1_gamma"], params["bn1_beta"],
                                  params["bn1_mean"], params["bn1_var"], eps)
    w2, b2 = _fold_bn_into_linear(params["fc2_w"], params["fc2_b"],
                                  params["bn2_gamma"], params["bn2_beta"],
                                  params["bn2_mean"], params["bn2_var"], eps)
    w3, b3 = _fold_bn_into_linear(params["fc3_w"], params["fc3_b"],
                                  params["bn3_gamma"], params["bn3_beta"],
                                  params["bn3_mean"], params["bn3_var"], eps)
    w1 = jnp.pad(w1, ((0, d_pad - input_dim), (0, 0)))

    # Merge mean / log_var heads into one lane-dense (>=128 wide) matmul.
    l_pad = max(128, _round_up(2 * L, 128))
    wh = jnp.concatenate([params["fc_mean_w"], params["fc_var_w"]], axis=1)
    bh = jnp.concatenate([params["fc_mean_b"], params["fc_var_b"]], axis=1)
    wh = jnp.pad(wh, ((0, 0), (0, l_pad - 2 * L))).astype(jnp.bfloat16)
    bh = jnp.pad(bh, ((0, 0), (0, l_pad - 2 * L))).astype(jnp.float32)

    prep = {"w1": w1, "b1": b1, "w2": w2, "b2": b2,
            "w3": w3, "b3": b3, "wh": wh, "bh": bh}
    cfg = EncoderConfig(input_dim=input_dim, latent_dim=L, d_pad=d_pad,
                        l_pad=l_pad, use_resident=bool(use_resident),
                        k_tile=int(k_tile), batch_tile=int(batch_tile),
                        single_buffer=bool(single_buffer),
                        vmem_cap=int(vmem_cap))
    return prep, cfg


# ---------------------------------------------------------------------------
# VMEM budgeting (trace-time Python arithmetic)
# ---------------------------------------------------------------------------

def _vmem_est_resident(tb, d_pad, l_pad, single_buf):
    wbuf = 1 if single_buf else 2
    weights = (d_pad * 1024 + 1024 * 512 + 512 * 256 + 256 * l_pad) * 2 * wbuf
    biases = (1024 + 512 + 256 + l_pad) * 4 * wbuf
    x_tile = 2 * tb * d_pad * 2            # double-buffered bf16 input tile
    out_tile = 2 * tb * l_pad * 4          # double-buffered f32 output tile
    temps = 4 * tb * 1024 * 4              # layer intermediates headroom
    return weights + biases + x_tile + out_tile + temps


def _vmem_est_streamed(tb, tk, l_pad, single_buf):
    wbuf = 1 if single_buf else 2
    nstream = 3 if single_buf else 2       # Buffered(3) on streamed tiles
    weights = (1024 * 512 + 512 * 256 + 256 * l_pad) * 2 * wbuf
    biases = (1024 + 512 + 256 + l_pad) * 4 * wbuf
    w1_tiles = nstream * tk * 1024 * 2
    x_tiles = nstream * tb * tk * 2
    out_tile = 2 * tb * l_pad * 4
    acc = tb * 1024 * 4
    temps = 4 * tb * 1024 * 4
    return weights + biases + w1_tiles + x_tiles + out_tile + acc + temps


# ---------------------------------------------------------------------------
# Forward (jitted; cfg is static)
# ---------------------------------------------------------------------------

@functools.partial(jax.jit, static_argnames=("cfg",))
def encoder_apply(x, prep, cfg):
    B, D = x.shape
    assert D == cfg.input_dim, "input feature dim mismatch with prepared params"
    L, Lpad = cfg.latent_dim, cfg.l_pad
    sbuf = cfg.single_buffer

    # ---- choose batch tile (as large as VMEM permits, default 512) --------
    TB = min(cfg.batch_tile, _round_up(B, 8))
    budget = int(cfg.vmem_cap * 0.85)
    if cfg.use_resident:
        est_fn = lambda tb: _vmem_est_resident(tb, cfg.d_pad, Lpad, sbuf)
    else:
        est_fn = lambda tb: _vmem_est_streamed(tb, cfg.k_tile, Lpad, sbuf)
    while TB > 8 and est_fn(TB) > budget:
        TB = max(8, _round_up(TB // 2, 8))
    # v7x megacore: with resident weights, guarantee >= 2 batch tiles when
    # B >= 16 so the "parallel" batch axis can shard across both TensorCores.
    # (Not applied in streaming mode to avoid re-streaming w1 per batch tile.)
    if cfg.use_resident and _round_up(B, 8) >= 16 and _round_up(B, TB) // TB < 2:
        TB = max(8, _round_up(TB // 2, 8))

    B_pad = _round_up(B, TB)
    nb = B_pad // TB

    x_p = jnp.pad(x.astype(jnp.bfloat16),
                  ((0, B_pad - B), (0, cfg.d_pad - D)))

    # Explicit VMEM limit, clamped to the device's actual capacity (v7x-safe).
    vmem_limit = int(min(max(est_fn(TB) + (4 << 20), 32 << 20),
                         int(cfg.vmem_cap * 0.88)))

    inputs = (x_p, prep["w1"], prep["b1"], prep["w2"], prep["b2"],
              prep["w3"], prep["b3"], prep["wh"], prep["bh"])
    out_shape = jax.ShapeDtypeStruct((B_pad, Lpad), jnp.float32)

    if cfg.use_resident:
        # -------- resident-w1 path: 1-D batch grid, no accumulator ---------
        def const_spec(shape):
            zeros = (0,) * len(shape)
            if sbuf:
                return pl.BlockSpec(shape, lambda i, _z=zeros: _z,
                                    pipeline_mode=pl.Buffered(1))
            return pl.BlockSpec(shape, lambda i, _z=zeros: _z)

        in_specs = [
            pl.BlockSpec((TB, cfg.d_pad), lambda i: (i, 0)),      # x tile
            const_spec((cfg.d_pad, 1024)), const_spec((1, 1024)),
            const_spec((1024, 512)), const_spec((1, 512)),
            const_spec((512, 256)), const_spec((1, 256)),
            const_spec((256, Lpad)), const_spec((1, Lpad)),
        ]
        out_specs = pl.BlockSpec((TB, Lpad), lambda i: (i, 0))
        grid = (nb,)
        semantics = ("parallel",)
        kernel = _encoder_kernel_resident
        scratch = []
    else:
        # -------- streamed-fc1 path: (batch, K) grid with accumulator ------
        TK = cfg.k_tile
        nk = cfg.d_pad // TK

        def const_spec(shape):
            zeros = (0,) * len(shape)
            if sbuf:
                return pl.BlockSpec(shape, lambda i, k, _z=zeros: _z,
                                    pipeline_mode=pl.Buffered(1))
            return pl.BlockSpec(shape, lambda i, k, _z=zeros: _z)

        def streamed_spec(shape, idx):
            if sbuf:
                return pl.BlockSpec(shape, idx, pipeline_mode=pl.Buffered(3))
            return pl.BlockSpec(shape, idx)

        in_specs = [
            streamed_spec((TB, TK), lambda i, k: (i, k)),          # x tile
            streamed_spec((TK, 1024), lambda i, k: (k, 0)),        # w1 tile
            const_spec((1, 1024)),
            const_spec((1024, 512)), const_spec((1, 512)),
            const_spec((512, 256)), const_spec((1, 256)),
            const_spec((256, Lpad)), const_spec((1, Lpad)),
        ]
        out_specs = pl.BlockSpec((TB, Lpad), lambda i, k: (i, 0))
        grid = (nb, nk)
        semantics = ("parallel", "arbitrary")
        kernel = _encoder_kernel_streamed
        scratch = [pltpu.VMEM((TB, 1024), jnp.float32)]

    out = pl.pallas_call(
        kernel,
        grid_spec=pltpu.PrefetchScalarGridSpec(
            num_scalar_prefetch=0,
            grid=grid,
            in_specs=in_specs,
            out_specs=out_specs,
            scratch_shapes=scratch,
        ),
        out_shape=out_shape,
        compiler_params=pltpu.CompilerParams(
            dimension_semantics=semantics,
            vmem_limit_bytes=vmem_limit,
        ),
    )(*inputs)

    mean = out[:B, :L]
    log_var = out[:B, L:2 * L]
    return mean, log_var


def encoder_forward(x, params, latent_dim, *, batch_tile=512, k_tile=1024):
    """One-shot convenience wrapper.  For repeated calls, hoist
    prepare_encoder_params() and reuse encoder_apply()."""
    prep, cfg = prepare_encoder_params(params, latent_dim,
                                       k_tile=k_tile, batch_tile=batch_tile)
    return encoder_apply(x, prep, cfg)


# ---------------------------------------------------------------------------
# Parameter init + references
# ---------------------------------------------------------------------------

def init_encoder_params(key, input_dim, latent_dim, dtype=jnp.float32):
    """Deterministic PyTorch-style (uniform +/- 1/sqrt(fan_in)) init."""
    dims = [(input_dim, 1024), (1024, 512), (512, 256),
            (256, latent_dim), (256, latent_dim)]
    params = {}
    names = ["fc1", "fc2", "fc3", "fc_mean", "fc_var"]
    keys = jax.random.split(key, 2 * len(dims))
    for i, (name, (fin, fout)) in enumerate(zip(names, dims)):
        bound = 1.0 / (fin ** 0.5)
        params[name + "_w"] = jax.random.uniform(
            keys[2 * i], (fin, fout), dtype, minval=-bound, maxval=bound)
        params[name + "_b"] = jax.random.uniform(
            keys[2 * i + 1], (1, fout), dtype, minval=-bound, maxval=bound)
    for name, width in [("bn1", 1024), ("bn2", 512), ("bn3", 256)]:
        params[name + "_gamma"] = jnp.ones((1, width), dtype)
        params[name + "_beta"] = jnp.zeros((1, width), dtype)
        params[name + "_mean"] = jnp.zeros((1, width), dtype)
        params[name + "_var"] = jnp.ones((1, width), dtype)
    return params


def encoder_reference(x, params, eps=1e-5):
    """Exact eval-mode forward in f32 (matches the PyTorch module)."""
    def layer(h, w, b, g, bt, m, v):
        h = h @ w + b
        h = (h - m) * jax.lax.rsqrt(v + eps) * g + bt
        return jnp.where(h > 0, h, 0.01 * h)

    h = layer(x, params["fc1_w"], params["fc1_b"], params["bn1_gamma"],
              params["bn1_beta"], params["bn1_mean"], params["bn1_var"])
    h = layer(h, params["fc2_w"], params["fc2_b"], params["bn2_gamma"],
              params["bn2_beta"], params["bn2_mean"], params["bn2_var"])
    h = layer(h, params["fc3_w"], params["fc3_b"], params["bn3_gamma"],
              params["bn3_beta"], params["bn3_mean"], params["bn3_var"])
    mean = h @ params["fc_mean_w"] + params["fc_mean_b"]
    log_var = h @ params["fc_var_w"] + params["fc_var_b"]
    return mean, log_var


def encoder_reference_bf16(x, params, eps=1e-5):
    """Pure-JAX reference emulating the kernel's bf16-weight / f32-acc numerics."""
    def fold(w, b, g, bt, m, v):
        s = g * jax.lax.rsqrt(v + eps)
        t = bt - m * s
        return (w * s).astype(jnp.bfloat16), b * s + t

    def lrelu(h):
        return jnp.where(h > 0, h, 0.01 * h)

    def dot(a, w):
        return jnp.dot(a.astype(jnp.bfloat16), w,
                       preferred_element_type=jnp.float32)

    w1, b1 = fold(params["fc1_w"], params["fc1_b"], params["bn1_gamma"],
                  params["bn1_beta"], params["bn1_mean"], params["bn1_var"])
    w2, b2 = fold(params["fc2_w"], params["fc2_b"], params["bn2_gamma"],
                  params["bn2_beta"], params["bn2_mean"], params["bn2_var"])
    w3, b3 = fold(params["fc3_w"], params["fc3_b"], params["bn3_gamma"],
                  params["bn3_beta"], params["bn3_mean"], params["bn3_var"])

    h = lrelu(dot(x, w1) + b1)
    h = lrelu(dot(h, w2) + b2)
    h = lrelu(dot(h, w3) + b3)
    mean = dot(h, params["fc_mean_w"].astype(jnp.bfloat16)) + params["fc_mean_b"]
    log_var = dot(h, params["fc_var_w"].astype(jnp.bfloat16)) + params["fc_var_b"]
    return mean, log_var


if __name__ == "__main__":
    B, INPUT_DIM, LATENT_DIM = 8, 64, 16

    key = jax.random.PRNGKey(0)
    k_x, k_p = jax.random.split(key)
    x = jax.random.normal(k_x, (B, INPUT_DIM), dtype=jnp.float32)
    params = init_encoder_params(k_p, INPUT_DIM, LATENT_DIM)

    # One-time preprocessing, then the jitted Pallas forward.
    prep, cfg = prepare_encoder_params(params, LATENT_DIM)
    mean, log_var = encoder_apply(x, prep, cfg)
    jax.block_until_ready((mean, log_var))

    assert mean.shape == (B, LATENT_DIM) and log_var.shape == (B, LATENT_DIM)

    # Tight check against a reference that emulates the kernel's bf16 numerics.
    m_bf, v_bf = encoder_reference_bf16(x, params)
    assert jnp.allclose(mean, m_bf, atol=2e-3, rtol=2e-3)
    assert jnp.allclose(log_var, v_bf, atol=2e-3, rtol=2e-3)

    # Loose check against the exact eval-mode f32 reference (bf16 rounding).
    m_f32, v_f32 = encoder_reference(x, params)
    assert jnp.allclose(mean, m_f32, atol=7e-2, rtol=7e-2)
    assert jnp.allclose(log_var, v_f32, atol=7e-2, rtol=7e-2)

    print("KERNEL_OK")
</pallas_src>

<mosaic_0001>
module attributes {stable_mosaic.version = 11 : i64} {
  func.func @_encoder_kernel_resident(%arg0: i32, %arg1: memref<8x128xbf16, #tpu.memory_space<vmem>>, %arg2: memref<128x1024xbf16, #tpu.memory_space<vmem>>, %arg3: memref<1x1024xf32, #tpu.memory_space<vmem>>, %arg4: memref<1024x512xbf16, #tpu.memory_space<vmem>>, %arg5: memref<1x512xf32, #tpu.memory_space<vmem>>, %arg6: memref<512x256xbf16, #tpu.memory_space<vmem>>, %arg7: memref<1x256xf32, #tpu.memory_space<vmem>>, %arg8: memref<256x128xbf16, #tpu.memory_space<vmem>>, %arg9: memref<1x128xf32, #tpu.memory_space<vmem>>, %arg10: memref<8x128xf32, #tpu.memory_space<vmem>>) attributes {dimension_semantics = [#tpu.dimension_semantics<parallel>], iteration_bounds = array<i64: 1>, scalar_prefetch = 0 : i64, scratch_operands = 0 : i64, tpu.core_type = #tpu.core_type<tc>, window_params = [{transform_indices = @transform_0, window_bounds = array<i64: 8, 128>}, {pipeline_mode = #tpu.pipeline_mode<synchronous>, transform_indices = @transform_1, window_bounds = array<i64: 128, 1024>}, {pipeline_mode = #tpu.pipeline_mode<synchronous>, transform_indices = @transform_2, window_bounds = array<i64: 1, 1024>}, {pipeline_mode = #tpu.pipeline_mode<synchronous>, transform_indices = @transform_3, window_bounds = array<i64: 1024, 512>}, {pipeline_mode = #tpu.pipeline_mode<synchronous>, transform_indices = @transform_4, window_bounds = array<i64: 1, 512>}, {pipeline_mode = #tpu.pipeline_mode<synchronous>, transform_indices = @transform_5, window_bounds = array<i64: 512, 256>}, {pipeline_mode = #tpu.pipeline_mode<synchronous>, transform_indices = @transform_6, window_bounds = array<i64: 1, 256>}, {pipeline_mode = #tpu.pipeline_mode<synchronous>, transform_indices = @transform_7, window_bounds = array<i64: 256, 128>}, {pipeline_mode = #tpu.pipeline_mode<synchronous>, transform_indices = @transform_8, window_bounds = array<i64: 1, 128>}, {transform_indices = @transform_9, window_bounds = array<i64: 8, 128>}]} {
    %c0 = arith.constant 0 : index
    %c0_0 = arith.constant 0 : index
    %0 = vector.load %arg1[%c0, %c0_0] : memref<8x128xbf16, #tpu.memory_space<vmem>>, vector<8x128xbf16>
    %c0_1 = arith.constant 0 : index
    %c0_2 = arith.constant 0 : index
    %1 = vector.load %arg2[%c0_1, %c0_2] : memref<128x1024xbf16, #tpu.memory_space<vmem>>, vector<128x1024xbf16>
    %cst = arith.constant dense<0.000000e+00> : vector<8x1024xf32>
    %2 = tpu.matmul %0, %1, %cst {dimension_numbers = #tpu.dot_dimension_numbers<[1], [0], [0], [1], [0, 0, 1, 1], [], []>} : vector<8x128xbf16>, vector<128x1024xbf16>, vector<8x1024xf32> -> vector<8x1024xf32>
    %c0_3 = arith.constant 0 : index
    %c0_4 = arith.constant 0 : index
    %3 = vector.load %arg3[%c0_3, %c0_4] : memref<1x1024xf32, #tpu.memory_space<vmem>>, vector<1x1024xf32>
    %4 = vector.broadcast %3 : vector<1x1024xf32> to vector<8x1024xf32>
    %5 = arith.addf %2, %4 : vector<8x1024xf32>
    %cst_5 = arith.constant 0.000000e+00 : f32
    %6 = vector.broadcast %cst_5 : f32 to vector<8x1024xf32>
    %7 = arith.cmpf ogt, %5, %6 : vector<8x1024xf32>
    %cst_6 = arith.constant 0.00999999977 : f32
    %8 = vector.broadcast %cst_6 : f32 to vector<8x1024xf32>
    %9 = arith.mulf %8, %5 : vector<8x1024xf32>
    %10 = arith.select %7, %5, %9 : vector<8x1024xi1>, vector<8x1024xf32>
    %11 = arith.truncf %10 : vector<8x1024xf32> to vector<8x1024xbf16>
    %c0_7 = arith.constant 0 : index
    %c0_8 = arith.constant 0 : index
    %12 = vector.load %arg4[%c0_7, %c0_8] : memref<1024x512xbf16, #tpu.memory_space<vmem>>, vector<1024x512xbf16>
    %cst_9 = arith.constant dense<0.000000e+00> : vector<8x512xf32>
    %13 = tpu.matmul %11, %12, %cst_9 {dimension_numbers = #tpu.dot_dimension_numbers<[1], [0], [0], [1], [0, 0, 1, 1], [], []>} : vector<8x1024xbf16>, vector<1024x512xbf16>, vector<8x512xf32> -> vector<8x512xf32>
    %c0_10 = arith.constant 0 : index
    %c0_11 = arith.constant 0 : index
    %14 = vector.load %arg5[%c0_10, %c0_11] : memref<1x512xf32, #tpu.memory_space<vmem>>, vector<1x512xf32>
    %15 = vector.broadcast %14 : vector<1x512xf32> to vector<8x512xf32>
    %16 = arith.addf %13, %15 : vector<8x512xf32>
    %cst_12 = arith.constant 0.000000e+00 : f32
    %17 = vector.broadcast %cst_12 : f32 to vector<8x512xf32>
    %18 = arith.cmpf ogt, %16, %17 : vector<8x512xf32>
    %cst_13 = arith.constant 0.00999999977 : f32
    %19 = vector.broadcast %cst_13 : f32 to vector<8x512xf32>
    %20 = arith.mulf %19, %16 : vector<8x512xf32>
    %21 = arith.select %18, %16, %20 : vector<8x512xi1>, vector<8x512xf32>
    %22 = arith.truncf %21 : vector<8x512xf32> to vector<8x512xbf16>
    %c0_14 = arith.constant 0 : index
    %c0_15 = arith.constant 0 : index
    %23 = vector.load %arg6[%c0_14, %c0_15] : memref<512x256xbf16, #tpu.memory_space<vmem>>, vector<512x256xbf16>
    %cst_16 = arith.constant dense<0.000000e+00> : vector<8x256xf32>
    %24 = tpu.matmul %22, %23, %cst_16 {dimension_numbers = #tpu.dot_dimension_numbers<[1], [0], [0], [1], [0, 0, 1, 1], [], []>} : vector<8x512xbf16>, vector<512x256xbf16>, vector<8x256xf32> -> vector<8x256xf32>
    %c0_17 = arith.constant 0 : index
    %c0_18 = arith.constant 0 : index
    %25 = vector.load %arg7[%c0_17, %c0_18] : memref<1x256xf32, #tpu.memory_space<vmem>>, vector<1x256xf32>
    %26 = vector.broadcast %25 : vector<1x256xf32> to vector<8x256xf32>
    %27 = arith.addf %24, %26 : vector<8x256xf32>
    %cst_19 = arith.constant 0.000000e+00 : f32
    %28 = vector.broadcast %cst_19 : f32 to vector<8x256xf32>
    %29 = arith.cmpf ogt, %27, %28 : vector<8x256xf32>
    %cst_20 = arith.constant 0.00999999977 : f32
    %30 = vector.broadcast %cst_20 : f32 to vector<8x256xf32>
    %31 = arith.mulf %30, %27 : vector<8x256xf32>
    %32 = arith.select %29, %27, %31 : vector<8x256xi1>, vector<8x256xf32>
    %33 = arith.truncf %32 : vector<8x256xf32> to vector<8x256xbf16>
    %c0_21 = arith.constant 0 : index
    %c0_22 = arith.constant 0 : index
    %34 = vector.load %arg8[%c0_21, %c0_22] : memref<256x128xbf16, #tpu.memory_space<vmem>>, vector<256x128xbf16>
    %cst_23 = arith.constant dense<0.000000e+00> : vector<8x128xf32>
    %35 = tpu.matmul %33, %34, %cst_23 {dimension_numbers = #tpu.dot_dimension_numbers<[1], [0], [0], [1], [0, 0, 1, 1], [], []>} : vector<8x256xbf16>, vector<256x128xbf16>, vector<8x128xf32> -> vector<8x128xf32>
    %c0_24 = arith.constant 0 : index
    %c0_25 = arith.constant 0 : index
    %36 = vector.load %arg9[%c0_24, %c0_25] : memref<1x128xf32, #tpu.memory_space<vmem>>, vector<1x128xf32>
    %37 = vector.broadcast %36 : vector<1x128xf32> to vector<8x128xf32>
    %38 = arith.addf %35, %37 : vector<8x128xf32>
    %c0_26 = arith.constant 0 : index
    %c0_27 = arith.constant 0 : index
    %39 = vector.load %arg10[%c0_26, %c0_27] : memref<8x128xf32, #tpu.memory_space<vmem>>, vector<8x128xf32>
    tpu.vector_store %arg10[%c0_26, %c0_27], %38 {strides = array<i32>} : memref<8x128xf32, #tpu.memory_space<vmem>>, vector<8x128xf32>,
    return
  }
  func.func @transform_0(%arg0: i32) -> (i32, i32) {
    %c0_i32 = arith.constant 0 : i32
    %c0_i32_0 = arith.constant 0 : i32
    return %arg0, %c0_i32 : i32, i32
  }
  func.func @transform_1(%arg0: i32) -> (i32, i32) {
    %c0_i32 = arith.constant 0 : i32
    %c0_i32_0 = arith.constant 0 : i32
    %c0_i32_1 = arith.constant 0 : i32
    return %c0_i32, %c0_i32_0 : i32, i32
  }
  func.func @transform_2(%arg0: i32) -> (i32, i32) {
    %c0_i32 = arith.constant 0 : i32
    %c0_i32_0 = arith.constant 0 : i32
    %c0_i32_1 = arith.constant 0 : i32
    return %c0_i32, %c0_i32_0 : i32, i32
  }
  func.func @transform_3(%arg0: i32) -> (i32, i32) {
    %c0_i32 = arith.constant 0 : i32
    %c0_i32_0 = arith.constant 0 : i32
    %c0_i32_1 = arith.constant 0 : i32
    return %c0_i32, %c0_i32_0 : i32, i32
  }
  func.func @transform_4(%arg0: i32) -> (i32, i32) {
    %c0_i32 = arith.constant 0 : i32
    %c0_i32_0 = arith.constant 0 : i32
    %c0_i32_1 = arith.constant 0 : i32
    return %c0_i32, %c0_i32_0 : i32, i32
  }
  func.func @transform_5(%arg0: i32) -> (i32, i32) {
    %c0_i32 = arith.constant 0 : i32
    %c0_i32_0 = arith.constant 0 : i32
    %c0_i32_1 = arith.constant 0 : i32
    return %c0_i32, %c0_i32_0 : i32, i32
  }
  func.func @transform_6(%arg0: i32) -> (i32, i32) {
    %c0_i32 = arith.constant 0 : i32
    %c0_i32_0 = arith.constant 0 : i32
    %c0_i32_1 = arith.constant 0 : i32
    return %c0_i32, %c0_i32_0 : i32, i32
  }
  func.func @transform_7(%arg0: i32) -> (i32, i32) {
    %c0_i32 = arith.constant 0 : i32
    %c0_i32_0 = arith.constant 0 : i32
    %c0_i32_1 = arith.constant 0 : i32
    return %c0_i32, %c0_i32_0 : i32, i32
  }
  func.func @transform_8(%arg0: i32) -> (i32, i32) {
    %c0_i32 = arith.constant 0 : i32
    %c0_i32_0 = arith.constant 0 : i32
    %c0_i32_1 = arith.constant 0 : i32
    return %c0_i32, %c0_i32_0 : i32, i32
  }
  func.func @transform_9(%arg0: i32) -> (i32, i32) {
    %c0_i32 = arith.constant 0 : i32
    %c0_i32_0 = arith.constant 0 : i32
    return %arg0, %c0_i32 : i32, i32
  }
}

</mosaic_0001>

<llo_original>
// kernel: encoder_apply.1
$region0: #{encoder_apply.1}
  #allocation0 [shape = 'u32[]', space=smem, size = 0x4, offset = 0x4, fixed_abs, tag = 'smem constant byte address 0x4 - core index']
  #allocation1 [shape = 'u32[144,128]{1,0:T(1,128)}', space=vmem, size = 0x12000, scoped, tag = 'internal scratch']
  %s0 = inlined_call_operand.vmem [shape: bf16[8,128], index: 0, kind: input, shape index: {}]
  %s1 = inlined_call_operand.hbm [shape: bf16[128,1024], index: 1, kind: input, shape index: {}]
  %s2 = inlined_call_operand.vmem [shape: f32[1,1024], index: 2, kind: input, shape index: {}]
  %s3 = inlined_call_operand.hbm [shape: bf16[1024,512], index: 3, kind: input, shape index: {}]
  %s4 = inlined_call_operand.vmem [shape: f32[1,512], index: 4, kind: input, shape index: {}]
  %s5 = inlined_call_operand.hbm [shape: bf16[512,256], index: 5, kind: input, shape index: {}]
  %s6 = inlined_call_operand.vmem [shape: f32[1,256], index: 6, kind: input, shape index: {}]
  %s7 = inlined_call_operand.hbm [shape: bf16[256,128], index: 7, kind: input, shape index: {}]
  %s8 = inlined_call_operand.vmem [shape: f32[1,128], index: 8, kind: input, shape index: {}]
  %s9 = inlined_call_operand.vmem [shape: f32[8,128], index: 9, kind: output, shape index: {}]
  %s10 = sld [smem:[#allocation0]]
  $region62: #{encoder_apply.1} parent=0
    _
  %s12 = ssub.s32 1, %s10
  %s13 = scalar_select 0, %s12, %s10
  $region1: #{encoder_apply.1} parent=0
    #allocation2 [shape = 'u8[262144]{0}', space=vmem, size = 0x40000, scoped, tag = 'input window, operand 1, single buffered']
    #allocation3 [shape = 's32[1]{0}', space=sflag, size = 0x4, scoped, tag = 'scoped memory for encoder_apply.1']
    #allocation4 [shape = 'u8[1048576]{0}', space=vmem, size = 0x100000, scoped, tag = 'input window, operand 3, single buffered']
    #allocation5 [shape = 's32[1]{0}', space=sflag, size = 0x4, scoped, tag = 'scoped memory for encoder_apply.1']
    #allocation6 [shape = 'u8[262144]{0}', space=vmem, size = 0x40000, scoped, tag = 'input window, operand 5, single buffered']
    #allocation7 [shape = 'u8[65536]{0}', space=vmem, size = 0x10000, scoped, tag = 'input window, operand 7, single buffered']
    #allocation8 [shape = 's32[1]{0}', space=sflag, size = 0x4, scoped, tag = 'scoped memory for encoder_apply.1']
    %14 = vsyncpa [#allocation3], 0
    %15 = vsyncpa [#allocation5], 0
    %16 = vsyncpa [#allocation8], 0
    // Predicated region
    $region2: #{encoder_apply.1} parent=1 // pred_check
      _
    $region3: #{encoder_apply.1} parent=1 // pred_check_branch
      %18 = sbr.rel (0) target = $region5
    $region4: #{encoder_apply.1} parent=1 // pred_region
      _
    $region5: #{encoder_apply.1} parent=1 // pred_fallthru
      _
    // Predicated region
    $region6: #{encoder_apply.1} parent=1 // pred_check
      _
    $region7: #{encoder_apply.1} parent=1 // pred_check_branch
      %20 = sbr.rel (0) target = $region9
    $region8: #{encoder_apply.1} parent=1 // pred_region
      %s22 = ssub.s32 8192, 8192
      %23 = vsyncadd [#allocation3], %s22
      %s24 = sshll.u32 [#allocation2], 4
      %s25 = int_to_ptr.vmem [resolvable:$true] %s24
      %30 = dma.hbm_to_vmem [thread:$0]  %s1, 8192, %s25, [#allocation3], 512, 512, 32
    $region9: #{encoder_apply.1} parent=1 // pred_fallthru
      _
    // Predicated region
    $region10: #{encoder_apply.1} parent=1 // pred_check
      _
    $region11: #{encoder_apply.1} parent=1 // pred_check_branch
      %32 = sbr.rel (0) target = $region13
    $region12: #{encoder_apply.1} parent=1 // pred_region
      _
    $region13: #{encoder_apply.1} parent=1 // pred_fallthru
      _
    // Predicated region
    $region14: #{encoder_apply.1} parent=1 // pred_check
      _
    $region15: #{encoder_apply.1} parent=1 // pred_check_branch
      %34 = sbr.rel (0) target = $region17
    $region16: #{encoder_apply.1} parent=1 // pred_region
      %s36 = ssub.s32 32768, 32768
      %37 = vsyncadd [#allocation5], %s36
      %s38 = sshll.u32 [#allocation4], 4
      %s39 = int_to_ptr.vmem [resolvable:$true] %s38
      %44 = dma.hbm_to_vmem [thread:$0]  %s3, 32768, %s39, [#allocation5], 256, 256, 16
    $region17: #{encoder_apply.1} parent=1 // pred_fallthru
      _
    // Predicated region
    $region18: #{encoder_apply.1} parent=1 // pred_check
      _
    $region19: #{encoder_apply.1} parent=1 // pred_check_branch
      %46 = sbr.rel (0) target = $region21
    $region20: #{encoder_apply.1} parent=1 // pred_region
      _
    $region21: #{encoder_apply.1} parent=1 // pred_fallthru
      _
    // Predicated region
    $region22: #{encoder_apply.1} parent=1 // pred_check
      _
    $region23: #{encoder_apply.1} parent=1 // pred_check_branch
      %48 = sbr.rel (0) target = $region25
    $region24: #{encoder_apply.1} parent=1 // pred_region
      %s50 = ssub.s32 8192, 8192
      %51 = vsyncadd [#allocation5], %s50
      %s52 = sshll.u32 [#allocation6], 4
      %s53 = int_to_ptr.vmem [resolvable:$true] %s52
      %58 = dma.hbm_to_vmem [thread:$0]  %s5, 8192, %s53, [#allocation5], 128, 128, 8
    $region25: #{encoder_apply.1} parent=1 // pred_fallthru
      _
    // Predicated region
    $region26: #{encoder_apply.1} parent=1 // pred_check
      _
    $region27: #{encoder_apply.1} parent=1 // pred_check_branch
      %60 = sbr.rel (0) target = $region29
    $region28: #{encoder_apply.1} parent=1 // pred_region
      _
    $region29: #{encoder_apply.1} parent=1 // pred_fallthru
      _
    // Predicated region
    $region30: #{encoder_apply.1} parent=1 // pred_check
      _
    $region31: #{encoder_apply.1} parent=1 // pred_check_branch
      %62 = sbr.rel (0) target = $region33
    $region32: #{encoder_apply.1} parent=1 // pred_region
      %s64 = ssub.s32 2048, 2048
      %65 = vsyncadd [#allocation8], %s64
      %s66 = sshll.u32 [#allocation7], 4
      %s67 = int_to_ptr.vmem [resolvable:$true] %s66
      %72 = dma.hbm_to_vmem [thread:$0]  %s7, 2048, %s67, [#allocation8], 64, 64, 4
    $region33: #{encoder_apply.1} parent=1 // pred_fallthru
      _
    // Predicated region
    $region34: #{encoder_apply.1} parent=1 // pred_check
      _
    $region35: #{encoder_apply.1} parent=1 // pred_check_branch
      %74 = sbr.rel (0) target = $region37
    $region36: #{encoder_apply.1} parent=1 // pred_region
      _
    $region37: #{encoder_apply.1} parent=1 // pred_fallthru
      _
    // Predicated region
    $region38: #{encoder_apply.1} parent=1 // pred_check
      _
    $region39: #{encoder_apply.1} parent=1 // pred_check_branch
      %76 = sbr.rel (0) target = $region41
    $region40: #{encoder_apply.1} parent=1 // pred_region
      %77 = dma.done [#allocation3], 8192
    $region41: #{encoder_apply.1} parent=1 // pred_fallthru
      _
    // Predicated region
    $region42: #{encoder_apply.1} parent=1 // pred_check
      _
    $region43: #{encoder_apply.1} parent=1 // pred_check_branch
      %79 = sbr.rel (0) target = $region45
    $region44: #{encoder_apply.1} parent=1 // pred_region
      %80 = dma.done [#allocation5], 32768
    $region45: #{encoder_apply.1} parent=1 // pred_fallthru
      _
    // Predicated region
    $region46: #{encoder_apply.1} parent=1 // pred_check
      _
    $region47: #{encoder_apply.1} parent=1 // pred_check_branch
      %82 = sbr.rel (0) target = $region49
    $region48: #{encoder_apply.1} parent=1 // pred_region
      %83 = dma.done [#allocation5], 8192
    $region49: #{encoder_apply.1} parent=1 // pred_fallthru
      _
    // Predicated region
    $region50: #{encoder_apply.1} parent=1 // pred_check
      _
    $region51: #{encoder_apply.1} parent=1 // pred_check_branch
      %85 = sbr.rel (0) target = $region53
    $region52: #{encoder_apply.1} parent=1 // pred_region
      %86 = dma.done [#allocation8], 2048
    $region53: #{encoder_apply.1} parent=1 // pred_fallthru
      _
    %v88 = vld [vmem:[%s0] sm:$0xf]
    %v89 = vld [vmem:[#allocation2] sm:$0xff]
    %v90 = vld [vmem:[#allocation2 + $0x8] sm:$0xff]
    %v91 = vld [vmem:[#allocation2 + $0x10] sm:$0xff]
    %v92 = vld [vmem:[#allocation2 + $0x18] sm:$0xff]
    %v93 = vld [vmem:[#allocation2 + $0x20] sm:$0xff]
    %v94 = vld [vmem:[#allocation2 + $0x28] sm:$0xff]
    %v95 = vld [vmem:[#allocation2 + $0x30] sm:$0xff]
    %v96 = vld [vmem:[#allocation2 + $0x38] sm:$0xff]
    %v97 = vld [vmem:[#allocation2 + $0x40] sm:$0xff]
    %v98 = vld [vmem:[#allocation2 + $0x48] sm:$0xff]
    %v99 = vld [vmem:[#allocation2 + $0x50] sm:$0xff]
    %v100 = vld [vmem:[#allocation2 + $0x58] sm:$0xff]
    %v101 = vld [vmem:[#allocation2 + $0x60] sm:$0xff]
    %v102 = vld [vmem:[#allocation2 + $0x68] sm:$0xff]
    %v103 = vld [vmem:[#allocation2 + $0x70] sm:$0xff]
    %v104 = vld [vmem:[#allocation2 + $0x78] sm:$0xff]
    %v105 = vld [vmem:[#allocation2 + $0x80] sm:$0xff]
    %v106 = vld [vmem:[#allocation2 + $0x88] sm:$0xff]
    %v107 = vld [vmem:[#allocation2 + $0x90] sm:$0xff]
    %v108 = vld [vmem:[#allocation2 + $0x98] sm:$0xff]
    %v109 = vld [vmem:[#allocation2 + $0xa0] sm:$0xff]
    %v110 = vld [vmem:[#allocation2 + $0xa8] sm:$0xff]
    %v111 = vld [vmem:[#allocation2 + $0xb0] sm:$0xff]
    %v112 = vld [vmem:[#allocation2 + $0xb8] sm:$0xff]
    %v113 = vld [vmem:[#allocation2 + $0xc0] sm:$0xff]
    %v114 = vld [vmem:[#allocation2 + $0xc8] sm:$0xff]
    %v115 = vld [vmem:[#allocation2 + $0xd0] sm:$0xff]
    %v116 = vld [vmem:[#allocation2 + $0xd8] sm:$0xff]
    %v117 = vld [vmem:[#allocation2 + $0xe0] sm:$0xff]
    %v118 = vld [vmem:[#allocation2 + $0xe8] sm:$0xff]
    %v119 = vld [vmem:[#allocation2 + $0xf0] sm:$0xff]
    %v120 = vld [vmem:[#allocation2 + $0xf8] sm:$0xff]
    %v121 = vld [vmem:[#allocation2 + $0x100] sm:$0xff]
    %v122 = vld [vmem:[#allocation2 + $0x108] sm:$0xff]
    %v123 = vld [vmem:[#allocation2 + $0x110] sm:$0xff]
    %v124 = vld [vmem:[#allocation2 + $0x118] sm:$0xff]
    %v125 = vld [vmem:[#allocation2 + $0x120] sm:$0xff]
    %v126 = vld [vmem:[#allocation2 + $0x128] sm:$0xff]
    %v127 = vld [vmem:[#allocation2 + $0x130] sm:$0xff]
    %v128 = vld [vmem:[#allocation2 + $0x138] sm:$0xff]
    %v129 = vld [vmem:[#allocation2 + $0x140] sm:$0xff]
    %v130 = vld [vmem:[#allocation2 + $0x148] sm:$0xff]
    %v131 = vld [vmem:[#allocation2 + $0x150] sm:$0xff]
    %v132 = vld [vmem:[#allocation2 + $0x158] sm:$0xff]
    %v133 = vld [vmem:[#allocation2 + $0x160] sm:$0xff]
    %v134 = vld [vmem:[#allocation2 + $0x168] sm:$0xff]
    %v135 = vld [vmem:[#allocation2 + $0x170] sm:$0xff]
    %v136 = vld [vmem:[#allocation2 + $0x178] sm:$0xff]
    %v137 = vld [vmem:[#allocation2 + $0x180] sm:$0xff]
    %v138 = vld [vmem:[#allocation2 + $0x188] sm:$0xff]
    %v139 = vld [vmem:[#allocation2 + $0x190] sm:$0xff]
    %v140 = vld [vmem:[#allocation2 + $0x198] sm:$0xff]
    %v141 = vld [vmem:[#allocation2 + $0x1a0] sm:$0xff]
    %v142 = vld [vmem:[#allocation2 + $0x1a8] sm:$0xff]
    %v143 = vld [vmem:[#allocation2 + $0x1b0] sm:$0xff]
    %v144 = vld [vmem:[#allocation2 + $0x1b8] sm:$0xff]
    %v145 = vld [vmem:[#allocation2 + $0x1c0] sm:$0xff]
    %v146 = vld [vmem:[#allocation2 + $0x1c8] sm:$0xff]
    %v147 = vld [vmem:[#allocation2 + $0x1d0] sm:$0xff]
    %v148 = vld [vmem:[#allocation2 + $0x1d8] sm:$0xff]
    %v149 = vld [vmem:[#allocation2 + $0x1e0] sm:$0xff]
    %v150 = vld [vmem:[#allocation2 + $0x1e8] sm:$0xff]
    %v151 = vld [vmem:[#allocation2 + $0x1f0] sm:$0xff]
    %v152 = vld [vmem:[#allocation2 + $0x1f8] sm:$0xff]
    %v153 = vld [vmem:[%s2] sm:$0xff]
    %v155 = vlaneseq
    %v156 = vshrl.u32 %v155, 7
    %v157 = vsub.s32 0, %v156
    %v158 = vrot.slane %v153, %v157
    %v159 = vlaneseq
    %v160 = vshrl.u32 %v159, 7
    %v161 = vsub.s32 1, %v160
    %v162 = vrot.slane %v153, %v161
    %v163 = vlaneseq
    %v164 = vshrl.u32 %v163, 7
    %v165 = vsub.s32 2, %v164
    %v166 = vrot.slane %v153, %v165
    %v167 = vlaneseq
    %v168 = vshrl.u32 %v167, 7
    %v169 = vsub.s32 3, %v168
    %v170 = vrot.slane %v153, %v169
    %v171 = vlaneseq
    %v172 = vshrl.u32 %v171, 7
    %v173 = vsub.s32 4, %v172
    %v174 = vrot.slane %v153, %v173
    %v175 = vlaneseq
    %v176 = vshrl.u32 %v175, 7
    %v177 = vsub.s32 5, %v176
    %v178 = vrot.slane %v153, %v177
    %v179 = vlaneseq
    %v180 = vshrl.u32 %v179, 7
    %v181 = vsub.s32 6, %v180
    %v182 = vrot.slane %v153, %v181
    %v183 = vlaneseq
    %v184 = vshrl.u32 %v183, 7
    %v185 = vsub.s32 7, %v184
    %v186 = vrot.slane %v153, %v185
    %v259 = vunpack.c.l.b16 %v89
    %v260 = vunpack.c.h.b16 %v89
    %v261 = vunpack.c.l.b16 %v90
    %v262 = vunpack.c.h.b16 %v90
    %v263 = vunpack.c.l.b16 %v91
    %v264 = vunpack.c.h.b16 %v91
    %v265 = vunpack.c.l.b16 %v92
    %v266 = vunpack.c.h.b16 %v92
    %v267 = vunpack.c.l.b16 %v93
    %v268 = vunpack.c.h.b16 %v93
    %v269 = vunpack.c.l.b16 %v94
    %v270 = vunpack.c.h.b16 %v94
    %v271 = vunpack.c.l.b16 %v95
    %v272 = vunpack.c.h.b16 %v95
    %v273 = vunpack.c.l.b16 %v96
    %v274 = vunpack.c.h.b16 %v96
    %v275 = vunpack.c.l.b16 %v97
    %v276 = vunpack.c.h.b16 %v97
    %v277 = vunpack.c.l.b16 %v98
    %v278 = vunpack.c.h.b16 %v98
    %v279 = vunpack.c.l.b16 %v99
    %v280 = vunpack.c.h.b16 %v99
    %v281 = vunpack.c.l.b16 %v100
    %v282 = vunpack.c.h.b16 %v100
    %v283 = vunpack.c.l.b16 %v101
    %v284 = vunpack.c.h.b16 %v101
    %v285 = vunpack.c.l.b16 %v102
    %v286 = vunpack.c.h.b16 %v102
    %v287 = vunpack.c.l.b16 %v103
    %v288 = vunpack.c.h.b16 %v103
    %v289 = vunpack.c.l.b16 %v104
    %v290 = vunpack.c.h.b16 %v104
    %v291 = vunpack.c.l.b16 %v105
    %v292 = vunpack.c.h.b16 %v105
    %v293 = vunpack.c.l.b16 %v106
    %v294 = vunpack.c.h.b16 %v106
    %v295 = vunpack.c.l.b16 %v107
    %v296 = vunpack.c.h.b16 %v107
    %v297 = vunpack.c.l.b16 %v108
    %v298 = vunpack.c.h.b16 %v108
    %v299 = vunpack.c.l.b16 %v109
    %v300 = vunpack.c.h.b16 %v109
    %v301 = vunpack.c.l.b16 %v110
    %v302 = vunpack.c.h.b16 %v110
    %v303 = vunpack.c.l.b16 %v111
    %v304 = vunpack.c.h.b16 %v111
    %v305 = vunpack.c.l.b16 %v112
    %v306 = vunpack.c.h.b16 %v112
    %v307 = vunpack.c.l.b16 %v113
    %v308 = vunpack.c.h.b16 %v113
    %v309 = vunpack.c.l.b16 %v114
    %v310 = vunpack.c.h.b16 %v114
    %v311 = vunpack.c.l.b16 %v115
    %v312 = vunpack.c.h.b16 %v115
    %v313 = vunpack.c.l.b16 %v116
    %v314 = vunpack.c.h.b16 %v116
    %v315 = vunpack.c.l.b16 %v117
    %v316 = vunpack.c.h.b16 %v117
    %v317 = vunpack.c.l.b16 %v118
    %v318 = vunpack.c.h.b16 %v118
    %v319 = vunpack.c.l.b16 %v119
    %v320 = vunpack.c.h.b16 %v119
    %v321 = vunpack.c.l.b16 %v120
    %v322 = vunpack.c.h.b16 %v120
    %v323 = vunpack.c.l.b16 %v121
    %v324 = vunpack.c.h.b16 %v121
    %v325 = vunpack.c.l.b16 %v122
    %v326 = vunpack.c.h.b16 %v122
    %v327 = vunpack.c.l.b16 %v123
    %v328 = vunpack.c.h.b16 %v123
    %v329 = vunpack.c.l.b16 %v124
    %v330 = vunpack.c.h.b16 %v124
    %v331 = vunpack.c.l.b16 %v125
    %v332 = vunpack.c.h.b16 %v125
    %v333 = vunpack.c.l.b16 %v126
    %v334 = vunpack.c.h.b16 %v126
    %v335 = vunpack.c.l.b16 %v127
    %v336 = vunpack.c.h.b16 %v127
    %v337 = vunpack.c.l.b16 %v128
    %v338 = vunpack.c.h.b16 %v128
    %v339 = vunpack.c.l.b16 %v129
    %v340 = vunpack.c.h.b16 %v129
    %v341 = vunpack.c.l.b16 %v130
    %v342 = vunpack.c.h.b16 %v130
    %v343 = vunpack.c.l.b16 %v131
    %v344 = vunpack.c.h.b16 %v131
    %v345 = vunpack.c.l.b16 %v132
    %v346 = vunpack.c.h.b16 %v132
    %v347 = vunpack.c.l.b16 %v133
    %v348 = vunpack.c.h.b16 %v133
    %v349 = vunpack.c.l.b16 %v134
    %v350 = vunpack.c.h.b16 %v134
    %v351 = vunpack.c.l.b16 %v135
    %v352 = vunpack.c.h.b16 %v135
    %v353 = vunpack.c.l.b16 %v136
    %v354 = vunpack.c.h.b16 %v136
    %v355 = vunpack.c.l.b16 %v137
    %v356 = vunpack.c.h.b16 %v137
    %v357 = vunpack.c.l.b16 %v138
    %v358 = vunpack.c.h.b16 %v138
    %v359 = vunpack.c.l.b16 %v139
    %v360 = vunpack.c.h.b16 %v139
    %v361 = vunpack.c.l.b16 %v140
    %v362 = vunpack.c.h.b16 %v140
    %v363 = vunpack.c.l.b16 %v141
    %v364 = vunpack.c.h.b16 %v141
    %v365 = vunpack.c.l.b16 %v142
    %v366 = vunpack.c.h.b16 %v142
    %v367 = vunpack.c.l.b16 %v143
    %v368 = vunpack.c.h.b16 %v143
    %v369 = vunpack.c.l.b16 %v144
    %v370 = vunpack.c.h.b16 %v144
    %v371 = vunpack.c.l.b16 %v145
    %v372 = vunpack.c.h.b16 %v145
    %v373 = vunpack.c.l.b16 %v146
    %v374 = vunpack.c.h.b16 %v146
    %v375 = vunpack.c.l.b16 %v147
    %v376 = vunpack.c.h.b16 %v147
    %v377 = vunpack.c.l.b16 %v148
    %v378 = vunpack.c.h.b16 %v148
    %v379 = vunpack.c.l.b16 %v149
    %v380 = vunpack.c.h.b16 %v149
    %v381 = vunpack.c.l.b16 %v150
    %v382 = vunpack.c.h.b16 %v150
    %v383 = vunpack.c.l.b16 %v151
    %v384 = vunpack.c.h.b16 %v151
    %v385 = vunpack.c.l.b16 %v152
    %v386 = vunpack.c.h.b16 %v152
    %v387 = vpack.c.b16 %v267, %v259
    %v388 = vpack.c.b16 %v268, %v260
    %v389 = vpack.c.b16 %v269, %v261
    %v390 = vpack.c.b16 %v270, %v262
    %v391 = vpack.c.b16 %v271, %v263
    %v392 = vpack.c.b16 %v272, %v264
    %v393 = vpack.c.b16 %v273, %v265
    %v394 = vpack.c.b16 %v274, %v266
    %v395 = vpack.c.b16 %v283, %v275
    %v396 = vpack.c.b16 %v284, %v276
    %v397 = vpack.c.b16 %v285, %v277
    %v398 = vpack.c.b16 %v286, %v278
    %v399 = vpack.c.b16 %v287, %v279
    %v400 = vpack.c.b16 %v288, %v280
    %v401 = vpack.c.b16 %v289, %v281
    %v402 = vpack.c.b16 %v290, %v282
    %v403 = vpack.c.b16 %v299, %v291
    %v404 = vpack.c.b16 %v300, %v292
    %v405 = vpack.c.b16 %v301, %v293
    %v406 = vpack.c.b16 %v302, %v294
    %v407 = vpack.c.b16 %v303, %v295
    %v408 = vpack.c.b16 %v304, %v296
    %v409 = vpack.c.b16 %v305, %v297
    %v410 = vpack.c.b16 %v306, %v298
    %v411 = vpack.c.b16 %v315, %v307
    %v412 = vpack.c.b16 %v316, %v308
    %v413 = vpack.c.b16 %v317, %v309
    %v414 = vpack.c.b16 %v318, %v310
    %v415 = vpack.c.b16 %v319, %v311
    %v416 = vpack.c.b16 %v320, %v312
    %v417 = vpack.c.b16 %v321, %v313
    %v418 = vpack.c.b16 %v322, %v314
    %v419 = vpack.c.b16 %v331, %v323
    %v420 = vpack.c.b16 %v332, %v324
    %v421 = vpack.c.b16 %v333, %v325
    %v422 = vpack.c.b16 %v334, %v326
    %v423 = vpack.c.b16 %v335, %v327
    %v424 = vpack.c.b16 %v336, %v328
    %v425 = vpack.c.b16 %v337, %v329
    %v426 = vpack.c.b16 %v338, %v330
    %v427 = vpack.c.b16 %v347, %v339
    %v428 = vpack.c.b16 %v348, %v340
    %v429 = vpack.c.b16 %v349, %v341
    %v430 = vpack.c.b16 %v350, %v342
    %v431 = vpack.c.b16 %v351, %v343
    %v432 = vpack.c.b16 %v352, %v344
    %v433 = vpack.c.b16 %v353, %v345
    %v434 = vpack.c.b16 %v354, %v346
    %v435 = vpack.c.b16 %v363, %v355
    %v436 = vpack.c.b16 %v364, %v356
    %v437 = vpack.c.b16 %v365, %v357
    %v438 = vpack.c.b16 %v366, %v358
    %v439 = vpack.c.b16 %v367, %v359
    %v440 = vpack.c.b16 %v368, %v360
    %v441 = vpack.c.b16 %v369, %v361
    %v442 = vpack.c.b16 %v370, %v362
    %v443 = vpack.c.b16 %v379, %v371
    %v444 = vpack.c.b16 %v380, %v372
    %v445 = vpack.c.b16 %v381, %v373
    %v446 = vpack.c.b16 %v382, %v374
    %v447 = vpack.c.b16 %v383, %v375
    %v448 = vpack.c.b16 %v384, %v376
    %v449 = vpack.c.b16 %v385, %v377
    %v450 = vpack.c.b16 %v386, %v378
    %515 = vmatprep.subr.bf16.mxu0 %v388
    %516 = vmatpush1.bf16.msra.mxu0 %v387
    %517 = vmatprep.subr.bf16.mxu0 %v396
    %518 = vmatpush1.bf16.msra.mxu0 %v395
    %519 = vmatprep.subr.bf16.mxu0 %v404
    %520 = vmatpush1.bf16.msra.mxu0 %v403
    %521 = vmatprep.subr.bf16.mxu0 %v412
    %522 = vmatpush1.bf16.msra.mxu0 %v411
    %523 = vmatprep.subr.bf16.mxu0 %v420
    %524 = vmatpush1.bf16.msra.mxu0 %v419
    %525 = vmatprep.subr.bf16.mxu0 %v428
    %526 = vmatpush1.bf16.msra.mxu0 %v427
    %527 = vmatprep.subr.bf16.mxu0 %v436
    %528 = vmatpush1.bf16.msra.mxu0 %v435
    %529 = vmatprep.subr.bf16.mxu0 %v444
    %530 = vmatpush1.bf16.msra.mxu0 %v443
    %531 = vmatprep.subr.bf16.mxu0 0
    %532 = vmatpush1.bf16.msra.mxu0 0
    %533 = vmatprep.subr.bf16.mxu0 0
    %534 = vmatpush1.bf16.msra.mxu0 0
    %535 = vmatprep.subr.bf16.mxu0 0
    %536 = vmatpush1.bf16.msra.mxu0 0
    %537 = vmatprep.subr.bf16.mxu0 0
    %538 = vmatpush1.bf16.msra.mxu0 0
    %539 = vmatprep.subr.bf16.mxu0 0
    %540 = vmatpush1.bf16.msra.mxu0 0
    %541 = vmatprep.subr.bf16.mxu0 0
    %542 = vmatpush1.bf16.msra.mxu0 0
    %543 = vmatprep.subr.bf16.mxu0 0
    %544 = vmatpush1.bf16.msra.mxu0 0
    %545 = vmatprep.subr.bf16.mxu0 0
    %546 = vmatpush1.bf16.msra.mxu0 0
    %547 = vmatprep.mubr.bf16.mxu0 0
    %548 = vmatmul.mubr.bf16.gmra.mrb[0].mxu0 %v88
    %v549 = vpop.f32.mrb[0].mxu0
    %v550 = vadd.f32 %v158, %v549
    %v551 = vpop.f32.mrb[0].mxu0
    %v552 = vadd.f32 %v162, %v551
    %v553 = vpop.f32.mrb[0].mxu0
    %v554 = vpop.f32.mrb[0].mxu0
    %555 = vdwg.mxu0
    %556 = vmatprep.subr.bf16.mxu0 %v390
    %557 = vmatpush1.bf16.msra.mxu0 %v389
    %558 = vmatprep.subr.bf16.mxu0 %v398
    %559 = vmatpush1.bf16.msra.mxu0 %v397
    %560 = vmatprep.subr.bf16.mxu0 %v406
    %561 = vmatpush1.bf16.msra.mxu0 %v405
    %562 = vmatprep.subr.bf16.mxu0 %v414
    %563 = vmatpush1.bf16.msra.mxu0 %v413
    %564 = vmatprep.subr.bf16.mxu0 %v422
    %565 = vmatpush1.bf16.msra.mxu0 %v421
    %566 = vmatprep.subr.bf16.mxu0 %v430
    %567 = vmatpush1.bf16.msra.mxu0 %v429
    %568 = vmatprep.subr.bf16.mxu0 %v438
    %569 = vmatpush1.bf16.msra.mxu0 %v437
    %570 = vmatprep.subr.bf16.mxu0 %v446
    %571 = vmatpush1.bf16.msra.mxu0 %v445
    %572 = vmatprep.subr.bf16.mxu0 0
    %573 = vmatpush1.bf16.msra.mxu0 0
    %574 = vmatprep.subr.bf16.mxu0 0
    %575 = vmatpush1.bf16.msra.mxu0 0
    %576 = vmatprep.subr.bf16.mxu0 0
    %577 = vmatpush1.bf16.msra.mxu0 0
    %578 = vmatprep.subr.bf16.mxu0 0
    %579 = vmatpush1.bf16.msra.mxu0 0
    %580 = vmatprep.subr.bf16.mxu0 0
    %581 = vmatpush1.bf16.msra.mxu0 0
    %582 = vmatprep.subr.bf16.mxu0 0
    %583 = vmatpush1.bf16.msra.mxu0 0
    %584 = vmatprep.subr.bf16.mxu0 0
    %585 = vmatpush1.bf16.msra.mxu0 0
    %586 = vmatprep.subr.bf16.mxu0 0
    %587 = vmatpush1.bf16.msra.mxu0 0
    %588 = vmatprep.mubr.bf16.mxu0 0
    %589 = vmatmul.mubr.bf16.gmra.mrb[0].mxu0 %v88
    %v590 = vpop.f32.mrb[0].mxu0
    %v591 = vadd.f32 %v166, %v590
    %v592 = vpop.f32.mrb[0].mxu0
    %v593 = vadd.f32 %v170, %v592
    %v594 = vpop.f32.mrb[0].mxu0
    %v595 = vpop.f32.mrb[0].mxu0
    %596 = vdwg.mxu0
    %597 = vmatprep.subr.bf16.mxu0 %v392
    %598 = vmatpush1.bf16.msra.mxu0 %v391
    %599 = vmatprep.subr.bf16.mxu0 %v400
    %600 = vmatpush1.bf16.msra.mxu0 %v399
    %601 = vmatprep.subr.bf16.mxu0 %v408
    %602 = vmatpush1.bf16.msra.mxu0 %v407
    %603 = vmatprep.subr.bf16.mxu0 %v416
    %604 = vmatpush1.bf16.msra.mxu0 %v415
    %605 = vmatprep.subr.bf16.mxu0 %v424
    %606 = vmatpush1.bf16.msra.mxu0 %v423
    %607 = vmatprep.subr.bf16.mxu0 %v432
    %608 = vmatpush1.bf16.msra.mxu0 %v431
    %609 = vmatprep.subr.bf16.mxu0 %v440
    %610 = vmatpush1.bf16.msra.mxu0 %v439
    %611 = vmatprep.subr.bf16.mxu0 %v448
    %612 = vmatpush1.bf16.msra.mxu0 %v447
    %613 = vmatprep.subr.bf16.mxu0 0
    %614 = vmatpush1.bf16.msra.mxu0 0
    %615 = vmatprep.subr.bf16.mxu0 0
    %616 = vmatpush1.bf16.msra.mxu0 0
    %617 = vmatprep.subr.bf16.mxu0 0
    %618 = vmatpush1.bf16.msra.mxu0 0
    %619 = vmatprep.subr.bf16.mxu0 0
    %620 = vmatpush1.bf16.msra.mxu0 0
    %621 = vmatprep.subr.bf16.mxu0 0
    %622 = vmatpush1.bf16.msra.mxu0 0
    %623 = vmatprep.subr.bf16.mxu0 0
    %624 = vmatpush1.bf16.msra.mxu0 0
    %625 = vmatprep.subr.bf16.mxu0 0
    %626 = vmatpush1.bf16.msra.mxu0 0
    %627 = vmatprep.subr.bf16.mxu0 0
    %628 = vmatpush1.bf16.msra.mxu0 0
    %629 = vmatprep.mubr.bf16.mxu0 0
    %630 = vmatmul.mubr.bf16.gmra.mrb[0].mxu0 %v88
    %v631 = vpop.f32.mrb[0].mxu0
    %v632 = vadd.f32 %v174, %v631
    %v633 = vpop.f32.mrb[0].mxu0
    %v634 = vadd.f32 %v178, %v633
    %v635 = vpop.f32.mrb[0].mxu0
    %v636 = vpop.f32.mrb[0].mxu0
    %637 = vdwg.mxu0
    %638 = vmatprep.subr.bf16.mxu0 %v394
    %639 = vmatpush1.bf16.msra.mxu0 %v393
    %640 = vmatprep.subr.bf16.mxu0 %v402
    %641 = vmatpush1.bf16.msra.mxu0 %v401
    %642 = vmatprep.subr.bf16.mxu0 %v410
    %643 = vmatpush1.bf16.msra.mxu0 %v409
    %644 = vmatprep.subr.bf16.mxu0 %v418
    %645 = vmatpush1.bf16.msra.mxu0 %v417
    %646 = vmatprep.subr.bf16.mxu0 %v426
    %647 = vmatpush1.bf16.msra.mxu0 %v425
    %648 = vmatprep.subr.bf16.mxu0 %v434
    %649 = vmatpush1.bf16.msra.mxu0 %v433
    %650 = vmatprep.subr.bf16.mxu0 %v442
    %651 = vmatpush1.bf16.msra.mxu0 %v441
    %652 = vmatprep.subr.bf16.mxu0 %v450
    %653 = vmatpush1.bf16.msra.mxu0 %v449
    %654 = vmatprep.subr.bf16.mxu0 0
    %655 = vmatpush1.bf16.msra.mxu0 0
    %656 = vmatprep.subr.bf16.mxu0 0
    %657 = vmatpush1.bf16.msra.mxu0 0
    %658 = vmatprep.subr.bf16.mxu0 0
    %659 = vmatpush1.bf16.msra.mxu0 0
    %660 = vmatprep.subr.bf16.mxu0 0
    %661 = vmatpush1.bf16.msra.mxu0 0
    %662 = vmatprep.subr.bf16.mxu0 0
    %663 = vmatpush1.bf16.msra.mxu0 0
    %664 = vmatprep.subr.bf16.mxu0 0
    %665 = vmatpush1.bf16.msra.mxu0 0
    %666 = vmatprep.subr.bf16.mxu0 0
    %667 = vmatpush1.bf16.msra.mxu0 0
    %668 = vmatprep.subr.bf16.mxu0 0
    %669 = vmatpush1.bf16.msra.mxu0 0
    %670 = vmatprep.mubr.bf16.mxu0 0
    %671 = vmatmul.mubr.bf16.gmra.mrb[0].mxu0 %v88
    %v672 = vpop.f32.mrb[0].mxu0
    %v673 = vadd.f32 %v182, %v672
    %v674 = vpop.f32.mrb[0].mxu0
    %v675 = vadd.f32 %v186, %v674
    %v676 = vpop.f32.mrb[0].mxu0
    %v677 = vpop.f32.mrb[0].mxu0
    %678 = vdwg.mxu0
    %vm679 = vcmp.gt.f32.partialorder %v550, 0.0
    %vm680 = vcmp.gt.f32.partialorder %v552, 0.0
    %vm681 = vcmp.gt.f32.partialorder %v591, 0.0
    %vm682 = vcmp.gt.f32.partialorder %v593, 0.0
    %vm683 = vcmp.gt.f32.partialorder %v632, 0.0
    %vm684 = vcmp.gt.f32.partialorder %v634, 0.0
    %vm685 = vcmp.gt.f32.partialorder %v673, 0.0
    %vm686 = vcmp.gt.f32.partialorder %v675, 0.0
    %v687 = vmul.f32 %v550, 0.01
    %v688 = vmul.f32 %v552, 0.01
    %v689 = vmul.f32 %v591, 0.01
    %v690 = vmul.f32 %v593, 0.01
    %v691 = vmul.f32 %v632, 0.01
    %v692 = vmul.f32 %v634, 0.01
    %v693 = vmul.f32 %v673, 0.01
    %v694 = vmul.f32 %v675, 0.01
    %v695 = vsel %vm679, %v550, %v687
    %v696 = vsel %vm680, %v552, %v688
    %v697 = vsel %vm681, %v591, %v689
    %v698 = vsel %vm682, %v593, %v690
    %v699 = vsel %vm683, %v632, %v691
    %v700 = vsel %vm684, %v634, %v692
    %v701 = vsel %vm685, %v673, %v693
    %v702 = vsel %vm686, %v675, %v694
    %v703 = vpack.c.bf16 %v695, %v695
    %v704 = vpack.c.bf16 %v696, %v696
    %v705 = vpack.c.bf16 %v697, %v697
    %v706 = vpack.c.bf16 %v698, %v698
    %v707 = vpack.c.bf16 %v699, %v699
    %v708 = vpack.c.bf16 %v700, %v700
    %v709 = vpack.c.bf16 %v701, %v701
    %v710 = vpack.c.bf16 %v702, %v702
    %v711 = vld [vmem:[#allocation4] sm:$0xff]
    %v712 = vld [vmem:[#allocation4 + $0x8] sm:$0xff]
    %v713 = vld [vmem:[#allocation4 + $0x10] sm:$0xff]
    %v714 = vld [vmem:[#allocation4 + $0x18] sm:$0xff]
    %v715 = vld [vmem:[#allocation4 + $0x20] sm:$0xff]
    %v716 = vld [vmem:[#allocation4 + $0x28] sm:$0xff]
    %v717 = vld [vmem:[#allocation4 + $0x30] sm:$0xff]
    %v718 = vld [vmem:[#allocation4 + $0x38] sm:$0xff]
    %v719 = vld [vmem:[#allocation4 + $0x40] sm:$0xff]
    %v720 = vld [vmem:[#allocation4 + $0x48] sm:$0xff]
    %v721 = vld [vmem:[#allocation4 + $0x50] sm:$0xff]
    %v722 = vld [vmem:[#allocation4 + $0x58] sm:$0xff]
    %v723 = vld [vmem:[#allocation4 + $0x60] sm:$0xff]
    %v724 = vld [vmem:[#allocation4 + $0x68] sm:$0xff]
    %v725 = vld [vmem:[#allocation4 + $0x70] sm:$0xff]
    %v726 = vld [vmem:[#allocation4 + $0x78] sm:$0xff]
    %v727 = vld [vmem:[#allocation4 + $0x80] sm:$0xff]
    %v728 = vld [vmem:[#allocation4 + $0x88] sm:$0xff]
    %v729 = vld [vmem:[#allocation4 + $0x90] sm:$0xff]
    %v730 = vld [vmem:[#allocation4 + $0x98] sm:$0xff]
    %v731 = vld [vmem:[#allocation4 + $0xa0] sm:$0xff]
    %v732 = vld [vmem:[#allocation4 + $0xa8] sm:$0xff]
    %v733 = vld [vmem:[#allocation4 + $0xb0] sm:$0xff]
    %v734 = vld [vmem:[#allocation4 + $0xb8] sm:$0xff]
    %v735 = vld [vmem:[#allocation4 + $0xc0] sm:$0xff]
    %v736 = vld [vmem:[#allocation4 + $0xc8] sm:$0xff]
    %v737 = vld [vmem:[#allocation4 + $0xd0] sm:$0xff]
    %v738 = vld [vmem:[#allocation4 + $0xd8] sm:$0xff]
    %v739 = vld [vmem:[#allocation4 + $0xe0] sm:$0xff]
    %v740 = vld [vmem:[#allocation4 + $0xe8] sm:$0xff]
    %v741 = vld [vmem:[#allocation4 + $0xf0] sm:$0xff]
    %v742 = vld [vmem:[#allocation4 + $0xf8] sm:$0xff]
    %v743 = vld [vmem:[#allocation4 + $0x100] sm:$0xff]
    %v744 = vld [vmem:[#allocation4 + $0x108] sm:$0xff]
    %v745 = vld [vmem:[#allocation4 + $0x110] sm:$0xff]
    %v746 = vld [vmem:[#allocation4 + $0x118] sm:$0xff]
    %v747 = vld [vmem:[#allocation4 + $0x120] sm:$0xff]
    %v748 = vld [vmem:[#allocation4 + $0x128] sm:$0xff]
    %v749 = vld [vmem:[#allocation4 + $0x130] sm:$0xff]
    %v750 = vld [vmem:[#allocation4 + $0x138] sm:$0xff]
    %v751 = vld [vmem:[#allocation4 + $0x140] sm:$0xff]
    %v752 = vld [vmem:[#allocation4 + $0x148] sm:$0xff]
    %v753 = vld [vmem:[#allocation4 + $0x150] sm:$0xff]
    %v754 = vld [vmem:[#allocation4 + $0x158] sm:$0xff]
    %v755 = vld [vmem:[#allocation4 + $0x160] sm:$0xff]
    %v756 = vld [vmem:[#allocation4 + $0x168] sm:$0xff]
    %v757 = vld [vmem:[#allocation4 + $0x170] sm:$0xff]
    %v758 = vld [vmem:[#allocation4 + $0x178] sm:$0xff]
    %v759 = vld [vmem:[#allocation4 + $0x180] sm:$0xff]
    %v760 = vld [vmem:[#allocation4 + $0x188] sm:$0xff]
    %v761 = vld [vmem:[#allocation4 + $0x190] sm:$0xff]
    %v762 = vld [vmem:[#allocation4 + $0x198] sm:$0xff]
    %v763 = vld [vmem:[#allocation4 + $0x1a0] sm:$0xff]
    %v764 = vld [vmem:[#allocation4 + $0x1a8] sm:$0xff]
    %v765 = vld [vmem:[#allocation4 + $0x1b0] sm:$0xff]
    %v766 = vld [vmem:[#allocation4 + $0x1b8] sm:$0xff]
    %v767 = vld [vmem:[#allocation4 + $0x1c0] sm:$0xff]
    %v768 = vld [vmem:[#allocation4 + $0x1c8] sm:$0xff]
    %v769 = vld [vmem:[#allocation4 + $0x1d0] sm:$0xff]
    %v770 = vld [vmem:[#allocation4 + $0x1d8] sm:$0xff]
    %v771 = vld [vmem:[#allocation4 + $0x1e0] sm:$0xff]
    %v772 = vld [vmem:[#allocation4 + $0x1e8] sm:$0xff]
    %v773 = vld [vmem:[#allocation4 + $0x1f0] sm:$0xff]
    %v774 = vld [vmem:[#allocation4 + $0x1f8] sm:$0xff]
    %v775 = vld [vmem:[#allocation4 + $0x200] sm:$0xff]
    %v776 = vld [vmem:[#allocation4 + $0x208] sm:$0xff]
    %v777 = vld [vmem:[#allocation4 + $0x210] sm:$0xff]
    %v778 = vld [vmem:[#allocation4 + $0x218] sm:$0xff]
    %v779 = vld [vmem:[#allocation4 + $0x220] sm:$0xff]
    %v780 = vld [vmem:[#allocation4 + $0x228] sm:$0xff]
    %v781 = vld [vmem:[#allocation4 + $0x230] sm:$0xff]
    %v782 = vld [vmem:[#allocation4 + $0x238] sm:$0xff]
    %v783 = vld [vmem:[#allocation4 + $0x240] sm:$0xff]
    %v784 = vld [vmem:[#allocation4 + $0x248] sm:$0xff]
    %v785 = vld [vmem:[#allocation4 + $0x250] sm:$0xff]
    %v786 = vld [vmem:[#allocation4 + $0x258] sm:$0xff]
    %v787 = vld [vmem:[#allocation4 + $0x260] sm:$0xff]
    %v788 = vld [vmem:[#allocation4 + $0x268] sm:$0xff]
    %v789 = vld [vmem:[#allocation4 + $0x270] sm:$0xff]
    %v790 = vld [vmem:[#allocation4 + $0x278] sm:$0xff]
    %v791 = vld [vmem:[#allocation4 + $0x280] sm:$0xff]
    %v792 = vld [vmem:[#allocation4 + $0x288] sm:$0xff]
    %v793 = vld [vmem:[#allocation4 + $0x290] sm:$0xff]
    %v794 = vld [vmem:[#allocation4 + $0x298] sm:$0xff]
    %v795 = vld [vmem:[#allocation4 + $0x2a0] sm:$0xff]
    %v796 = vld [vmem:[#allocation4 + $0x2a8] sm:$0xff]
    %v797 = vld [vmem:[#allocation4 + $0x2b0] sm:$0xff]
    %v798 = vld [vmem:[#allocation4 + $0x2b8] sm:$0xff]
    %v799 = vld [vmem:[#allocation4 + $0x2c0] sm:$0xff]
    %v800 = vld [vmem:[#allocation4 + $0x2c8] sm:$0xff]
    %v801 = vld [vmem:[#allocation4 + $0x2d0] sm:$0xff]
    %v802 = vld [vmem:[#allocation4 + $0x2d8] sm:$0xff]
    %v803 = vld [vmem:[#allocation4 + $0x2e0] sm:$0xff]
    %v804 = vld [vmem:[#allocation4 + $0x2e8] sm:$0xff]
    %v805 = vld [vmem:[#allocation4 + $0x2f0] sm:$0xff]
    %v806 = vld [vmem:[#allocation4 + $0x2f8] sm:$0xff]
    %v807 = vld [vmem:[#allocation4 + $0x300] sm:$0xff]
    %v808 = vld [vmem:[#allocation4 + $0x308] sm:$0xff]
    %v809 = vld [vmem:[#allocation4 + $0x310] sm:$0xff]
    %v810 = vld [vmem:[#allocation4 + $0x318] sm:$0xff]
    %v811 = vld [vmem:[#allocation4 + $0x320] sm:$0xff]
    %v812 = vld [vmem:[#allocation4 + $0x328] sm:$0xff]
    %v813 = vld [vmem:[#allocation4 + $0x330] sm:$0xff]
    %v814 = vld [vmem:[#allocation4 + $0x338] sm:$0xff]
    %v815 = vld [vmem:[#allocation4 + $0x340] sm:$0xff]
    %v816 = vld [vmem:[#allocation4 + $0x348] sm:$0xff]
    %v817 = vld [vmem:[#allocation4 + $0x350] sm:$0xff]
    %v818 = vld [vmem:[#allocation4 + $0x358] sm:$0xff]
    %v819 = vld [vmem:[#allocation4 + $0x360] sm:$0xff]
    %v820 = vld [vmem:[#allocation4 + $0x368] sm:$0xff]
    %v821 = vld [vmem:[#allocation4 + $0x370] sm:$0xff]
    %v822 = vld [vmem:[#allocation4 + $0x378] sm:$0xff]
    %v823 = vld [vmem:[#allocation4 + $0x380] sm:$0xff]
    %v824 = vld [vmem:[#allocation4 + $0x388] sm:$0xff]
    %v825 = vld [vmem:[#allocation4 + $0x390] sm:$0xff]
    %v826 = vld [vmem:[#allocation4 + $0x398] sm:$0xff]
    %v827 = vld [vmem:[#allocation4 + $0x3a0] sm:$0xff]
    %v828 = vld [vmem:[#allocation4 + $0x3a8] sm:$0xff]
    %v829 = vld [vmem:[#allocation4 + $0x3b0] sm:$0xff]
    %v830 = vld [vmem:[#allocation4 + $0x3b8] sm:$0xff]
    %v831 = vld [vmem:[#allocation4 + $0x3c0] sm:$0xff]
    %v832 = vld [vmem:[#allocation4 + $0x3c8] sm:$0xff]
    %v833 = vld [vmem:[#allocation4 + $0x3d0] sm:$0xff]
    %v834 = vld [vmem:[#allocation4 + $0x3d8] sm:$0xff]
    %v835 = vld [vmem:[#allocation4 + $0x3e0] sm:$0xff]
    %v836 = vld [vmem:[#allocation4 + $0x3e8] sm:$0xff]
    %v837 = vld [vmem:[#allocation4 + $0x3f0] sm:$0xff]
    %v838 = vld [vmem:[#allocation4 + $0x3f8] sm:$0xff]
    %v839 = vld [vmem:[#allocation4 + $0x400] sm:$0xff]
    %v840 = vld [vmem:[#allocation4 + $0x408] sm:$0xff]
    %v841 = vld [vmem:[#allocation4 + $0x410] sm:$0xff]
    %v842 = vld [vmem:[#allocation4 + $0x418] sm:$0xff]
    %v843 = vld [vmem:[#allocation4 + $0x420] sm:$0xff]
    %v844 = vld [vmem:[#allocation4 + $0x428] sm:$0xff]
    %v845 = vld [vmem:[#allocation4 + $0x430] sm:$0xff]
    %v846 = vld [vmem:[#allocation4 + $0x438] sm:$0xff]
    %v847 = vld [vmem:[#allocation4 + $0x440] sm:$0xff]
    %v848 = vld [vmem:[#allocation4 + $0x448] sm:$0xff]
    %v849 = vld [vmem:[#allocation4 + $0x450] sm:$0xff]
    %v850 = vld [vmem:[#allocation4 + $0x458] sm:$0xff]
    %v851 = vld [vmem:[#allocation4 + $0x460] sm:$0xff]
    %v852 = vld [vmem:[#allocation4 + $0x468] sm:$0xff]
    %v853 = vld [vmem:[#allocation4 + $0x470] sm:$0xff]
    %v854 = vld [vmem:[#allocation4 + $0x478] sm:$0xff]
    %v855 = vld [vmem:[#allocation4 + $0x480] sm:$0xff]
    %v856 = vld [vmem:[#allocation4 + $0x488] sm:$0xff]
    %v857 = vld [vmem:[#allocation4 + $0x490] sm:$0xff]
    %v858 = vld [vmem:[#allocation4 + $0x498] sm:$0xff]
    %v859 = vld [vmem:[#allocation4 + $0x4a0] sm:$0xff]
    %v860 = vld [vmem:[#allocation4 + $0x4a8] sm:$0xff]
    %v861 = vld [vmem:[#allocation4 + $0x4b0] sm:$0xff]
    %v862 = vld [vmem:[#allocation4 + $0x4b8] sm:$0xff]
    %v863 = vld [vmem:[#allocation4 + $0x4c0] sm:$0xff]
    %v864 = vld [vmem:[#allocation4 + $0x4c8] sm:$0xff]
    %v865 = vld [vmem:[#allocation4 + $0x4d0] sm:$0xff]
    %v866 = vld [vmem:[#allocation4 + $0x4d8] sm:$0xff]
    %v867 = vld [vmem:[#allocation4 + $0x4e0] sm:$0xff]
    %v868 = vld [vmem:[#allocation4 + $0x4e8] sm:$0xff]
    %v869 = vld [vmem:[#allocation4 + $0x4f0] sm:$0xff]
    %v870 = vld [vmem:[#allocation4 + $0x4f8] sm:$0xff]
    %v871 = vld [vmem:[#allocation4 + $0x500] sm:$0xff]
    %v872 = vld [vmem:[#allocation4 + $0x508] sm:$0xff]
    %v873 = vld [vmem:[#allocation4 + $0x510] sm:$0xff]
    %v874 = vld [vmem:[#allocation4 + $0x518] sm:$0xff]
    %v875 = vld [vmem:[#allocation4 + $0x520] sm:$0xff]
    %v876 = vld [vmem:[#allocation4 + $0x528] sm:$0xff]
    %v877 = vld [vmem:[#allocation4 + $0x530] sm:$0xff]
    %v878 = vld [vmem:[#allocation4 + $0x538] sm:$0xff]
    %v879 = vld [vmem:[#allocation4 + $0x540] sm:$0xff]
    %v880 = vld [vmem:[#allocation4 + $0x548] sm:$0xff]
    %v881 = vld [vmem:[#allocation4 + $0x550] sm:$0xff]
    %v882 = vld [vmem:[#allocation4 + $0x558] sm:$0xff]
    %v883 = vld [vmem:[#allocation4 + $0x560] sm:$0xff]
    %v884 = vld [vmem:[#allocation4 + $0x568] sm:$0xff]
    %v885 = vld [vmem:[#allocation4 + $0x570] sm:$0xff]
    %v886 = vld [vmem:[#allocation4 + $0x578] sm:$0xff]
    %v887 = vld [vmem:[#allocation4 + $0x580] sm:$0xff]
    %v888 = vld [vmem:[#allocation4 + $0x588] sm:$0xff]
    %v889 = vld [vmem:[#allocation4 + $0x590] sm:$0xff]
    %v890 = vld [vmem:[#allocation4 + $0x598] sm:$0xff]
    %v891 = vld [vmem:[#allocation4 + $0x5a0] sm:$0xff]
    %v892 = vld [vmem:[#allocation4 + $0x5a8] sm:$0xff]
    %v893 = vld [vmem:[#allocation4 + $0x5b0] sm:$0xff]
    %v894 = vld [vmem:[#allocation4 + $0x5b8] sm:$0xff]
    %v895 = vld [vmem:[#allocation4 + $0x5c0] sm:$0xff]
    %v896 = vld [vmem:[#allocation4 + $0x5c8] sm:$0xff]
    %v897 = vld [vmem:[#allocation4 + $0x5d0] sm:$0xff]
    %v898 = vld [vmem:[#allocation4 + $0x5d8] sm:$0xff]
    %v899 = vld [vmem:[#allocation4 + $0x5e0] sm:$0xff]
    %v900 = vld [vmem:[#allocation4 + $0x5e8] sm:$0xff]
    %v901 = vld [vmem:[#allocation4 + $0x5f0] sm:$0xff]
    %v902 = vld [vmem:[#allocation4 + $0x5f8] sm:$0xff]
    %v903 = vld [vmem:[#allocation4 + $0x600] sm:$0xff]
    %v904 = vld [vmem:[#allocation4 + $0x608] sm:$0xff]
    %v905 = vld [vmem:[#allocation4 + $0x610] sm:$0xff]
    %v906 = vld [vmem:[#allocation4 + $0x618] sm:$0xff]
    %v907 = vld [vmem:[#allocation4 + $0x620] sm:$0xff]
    %v908 = vld [vmem:[#allocation4 + $0x628] sm:$0xff]
    %v909 = vld [vmem:[#allocation4 + $0x630] sm:$0xff]
    %v910 = vld [vmem:[#allocation4 + $0x638] sm:$0xff]
    %v911 = vld [vmem:[#allocation4 + $0x640] sm:$0xff]
    %v912 = vld [vmem:[#allocation4 + $0x648] sm:$0xff]
    %v913 = vld [vmem:[#allocation4 + $0x650] sm:$0xff]
    %v914 = vld [vmem:[#allocation4 + $0x658] sm:$0xff]
    %v915 = vld [vmem:[#allocation4 + $0x660] sm:$0xff]
    %v916 = vld [vmem:[#allocation4 + $0x668] sm:$0xff]
    %v917 = vld [vmem:[#allocation4 + $0x670] sm:$0xff]
    %v918 = vld [vmem:[#allocation4 + $0x678] sm:$0xff]
    %v919 = vld [vmem:[#allocation4 + $0x680] sm:$0xff]
    %v920 = vld [vmem:[#allocation4 + $0x688] sm:$0xff]
    %v921 = vld [vmem:[#allocation4 + $0x690] sm:$0xff]
    %v922 = vld [vmem:[#allocation4 + $0x698] sm:$0xff]
    %v923 = vld [vmem:[#allocation4 + $0x6a0] sm:$0xff]
    %v924 = vld [vmem:[#allocation4 + $0x6a8] sm:$0xff]
    %v925 = vld [vmem:[#allocation4 + $0x6b0] sm:$0xff]
    %v926 = vld [vmem:[#allocation4 + $0x6b8] sm:$0xff]
    %v927 = vld [vmem:[#allocation4 + $0x6c0] sm:$0xff]
    %v928 = vld [vmem:[#allocation4 + $0x6c8] sm:$0xff]
    %v929 = vld [vmem:[#allocation4 + $0x6d0] sm:$0xff]
    %v930 = vld [vmem:[#allocation4 + $0x6d8] sm:$0xff]
    %v931 = vld [vmem:[#allocation4 + $0x6e0] sm:$0xff]
    %v932 = vld [vmem:[#allocation4 + $0x6e8] sm:$0xff]
    %v933 = vld [vmem:[#allocation4 + $0x6f0] sm:$0xff]
    %v934 = vld [vmem:[#allocation4 + $0x6f8] sm:$0xff]
    %v935 = vld [vmem:[#allocation4 + $0x700] sm:$0xff]
    %v936 = vld [vmem:[#allocation4 + $0x708] sm:$0xff]
    %v937 = vld [vmem:[#allocation4 + $0x710] sm:$0xff]
    %v938 = vld [vmem:[#allocation4 + $0x718] sm:$0xff]
    %v939 = vld [vmem:[#allocation4 + $0x720] sm:$0xff]
    %v940 = vld [vmem:[#allocation4 + $0x728] sm:$0xff]
    %v941 = vld [vmem:[#allocation4 + $0x730] sm:$0xff]
    %v942 = vld [vmem:[#allocation4 + $0x738] sm:$0xff]
    %v943 = vld [vmem:[#allocation4 + $0x740] sm:$0xff]
    %v944 = vld [vmem:[#allocation4 + $0x748] sm:$0xff]
    %v945 = vld [vmem:[#allocation4 + $0x750] sm:$0xff]
    %v946 = vld [vmem:[#allocation4 + $0x758] sm:$0xff]
    %v947 = vld [vmem:[#allocation4 + $0x760] sm:$0xff]
    %v948 = vld [vmem:[#allocation4 + $0x768] sm:$0xff]
    %v949 = vld [vmem:[#allocation4 + $0x770] sm:$0xff]
    %v950 = vld [vmem:[#allocation4 + $0x778] sm:$0xff]
    %v951 = vld [vmem:[#allocation4 + $0x780] sm:$0xff]
    %v952 = vld [vmem:[#allocation4 + $0x788] sm:$0xff]
    %v953 = vld [vmem:[#allocation4 + $0x790] sm:$0xff]
    %v954 = vld [vmem:[#allocation4 + $0x798] sm:$0xff]
    %v955 = vld [vmem:[#allocation4 + $0x7a0] sm:$0xff]
    %v956 = vld [vmem:[#allocation4 + $0x7a8] sm:$0xff]
    %v957 = vld [vmem:[#allocation4 + $0x7b0] sm:$0xff]
    %v958 = vld [vmem:[#allocation4 + $0x7b8] sm:$0xff]
    %v959 = vld [vmem:[#allocation4 + $0x7c0] sm:$0xff]
    %v960 = vld [vmem:[#allocation4 + $0x7c8] sm:$0xff]
    %v961 = vld [vmem:[#allocation4 + $0x7d0] sm:$0xff]
    %v962 = vld [vmem:[#allocation4 + $0x7d8] sm:$0xff]
    %v963 = vld [vmem:[#allocation4 + $0x7e0] sm:$0xff]
    %v964 = vld [vmem:[#allocation4 + $0x7e8] sm:$0xff]
    %v965 = vld [vmem:[#allocation4 + $0x7f0] sm:$0xff]
    %v966 = vld [vmem:[#allocation4 + $0x7f8] sm:$0xff]
    %v967 = vld [vmem:[%s4] sm:$0xf]
    %v969 = vlaneseq
    %v970 = vshrl.u32 %v969, 7
    %v971 = vsub.s32 0, %v970
    %v972 = vrot.slane %v967, %v971
    %v973 = vlaneseq
    %v974 = vshrl.u32 %v973, 7
    %v975 = vsub.s32 1, %v974
    %v976 = vrot.slane %v967, %v975
    %v977 = vlaneseq
    %v978 = vshrl.u32 %v977, 7
    %v979 = vsub.s32 2, %v978
    %v980 = vrot.slane %v967, %v979
    %v981 = vlaneseq
    %v982 = vshrl.u32 %v981, 7
    %v983 = vsub.s32 3, %v982
    %v984 = vrot.slane %v967, %v983
    %v1245 = vunpack.c.l.b16 %v711
    %v1246 = vunpack.c.h.b16 %v711
    %v1247 = vunpack.c.l.b16 %v712
    %v1248 = vunpack.c.h.b16 %v712
    %v1249 = vunpack.c.l.b16 %v713
    %v1250 = vunpack.c.h.b16 %v713
    %v1251 = vunpack.c.l.b16 %v714
    %v1252 = vunpack.c.h.b16 %v714
    %v1253 = vunpack.c.l.b16 %v715
    %v1254 = vunpack.c.h.b16 %v715
    %v1255 = vunpack.c.l.b16 %v716
    %v1256 = vunpack.c.h.b16 %v716
    %v1257 = vunpack.c.l.b16 %v717
    %v1258 = vunpack.c.h.b16 %v717
    %v1259 = vunpack.c.l.b16 %v718
    %v1260 = vunpack.c.h.b16 %v718
    %v1261 = vunpack.c.l.b16 %v719
    %v1262 = vunpack.c.h.b16 %v719
    %v1263 = vunpack.c.l.b16 %v720
    %v1264 = vunpack.c.h.b16 %v720
    %v1265 = vunpack.c.l.b16 %v721
    %v1266 = vunpack.c.h.b16 %v721
    %v1267 = vunpack.c.l.b16 %v722
    %v1268 = vunpack.c.h.b16 %v722
    %v1269 = vunpack.c.l.b16 %v723
    %v1270 = vunpack.c.h.b16 %v723
    %v1271 = vunpack.c.l.b16 %v724
    %v1272 = vunpack.c.h.b16 %v724
    %v1273 = vunpack.c.l.b16 %v725
    %v1274 = vunpack.c.h.b16 %v725
    %v1275 = vunpack.c.l.b16 %v726
    %v1276 = vunpack.c.h.b16 %v726
    %v1277 = vunpack.c.l.b16 %v727
    %v1278 = vunpack.c.h.b16 %v727
    %v1279 = vunpack.c.l.b16 %v728
    %v1280 = vunpack.c.h.b16 %v728
    %v1281 = vunpack.c.l.b16 %v729
    %v1282 = vunpack.c.h.b16 %v729
    %v1283 = vunpack.c.l.b16 %v730
    %v1284 = vunpack.c.h.b16 %v730
    %v1285 = vunpack.c.l.b16 %v731
    %v1286 = vunpack.c.h.b16 %v731
    %v1287 = vunpack.c.l.b16 %v732
    %v1288 = vunpack.c.h.b16 %v732
    %v1289 = vunpack.c.l.b16 %v733
    %v1290 = vunpack.c.h.b16 %v733
    %v1291 = vunpack.c.l.b16 %v734
    %v1292 = vunpack.c.h.b16 %v734
    %v1293 = vunpack.c.l.b16 %v735
    %v1294 = vunpack.c.h.b16 %v735
    %v1295 = vunpack.c.l.b16 %v736
    %v1296 = vunpack.c.h.b16 %v736
    %v1297 = vunpack.c.l.b16 %v737
    %v1298 = vunpack.c.h.b16 %v737
    %v1299 = vunpack.c.l.b16 %v738
    %v1300 = vunpack.c.h.b16 %v738
    %v1301 = vunpack.c.l.b16 %v739
    %v1302 = vunpack.c.h.b16 %v739
    %v1303 = vunpack.c.l.b16 %v740
    %v1304 = vunpack.c.h.b16 %v740
    %v1305 = vunpack.c.l.b16 %v741
    %v1306 = vunpack.c.h.b16 %v741
    %v1307 = vunpack.c.l.b16 %v742
    %v1308 = vunpack.c.h.b16 %v742
    %v1309 = vunpack.c.l.b16 %v743
    %v1310 = vunpack.c.h.b16 %v743
    %v1311 = vunpack.c.l.b16 %v744
    %v1312 = vunpack.c.h.b16 %v744
    %v1313 = vunpack.c.l.b16 %v745
    %v1314 = vunpack.c.h.b16 %v745
    %v1315 = vunpack.c.l.b16 %v746
    %v1316 = vunpack.c.h.b16 %v746
    %v1317 = vunpack.c.l.b16 %v747
    %v1318 = vunpack.c.h.b16 %v747
    %v1319 = vunpack.c.l.b16 %v748
    %v1320 = vunpack.c.h.b16 %v748
    %v1321 = vunpack.c.l.b16 %v749
    %v1322 = vunpack.c.h.b16 %v749
    %v1323 = vunpack.c.l.b16 %v750
    %v1324 = vunpack.c.h.b16 %v750
    %v1325 = vunpack.c.l.b16 %v751
    %v1326 = vunpack.c.h.b16 %v751
    %v1327 = vunpack.c.l.b16 %v752
    %v1328 = vunpack.c.h.b16 %v752
    %v1329 = vunpack.c.l.b16 %v753
    %v1330 = vunpack.c.h.b16 %v753
    %v1331 = vunpack.c.l.b16 %v754
    %v1332 = vunpack.c.h.b16 %v754
    %v1333 = vunpack.c.l.b16 %v755
    %v1334 = vunpack.c.h.b16 %v755
    %v1335 = vunpack.c.l.b16 %v756
    %v1336 = vunpack.c.h.b16 %v756
    %v1337 = vunpack.c.l.b16 %v757
    %v1338 = vunpack.c.h.b16 %v757
    %v1339 = vunpack.c.l.b16 %v758
    %v1340 = vunpack.c.h.b16 %v758
    %v1341 = vunpack.c.l.b16 %v759
    %v1342 = vunpack.c.h.b16 %v759
    %v1343 = vunpack.c.l.b16 %v760
    %v1344 = vunpack.c.h.b16 %v760
    %v1345 = vunpack.c.l.b16 %v761
    %v1346 = vunpack.c.h.b16 %v761
    %v1347 = vunpack.c.l.b16 %v762
    %v1348 = vunpack.c.h.b16 %v762
    %v1349 = vunpack.c.l.b16 %v763
    %v1350 = vunpack.c.h.b16 %v763
    %v1351 = vunpack.c.l.b16 %v764
    %v1352 = vunpack.c.h.b16 %v764
    %v1353 = vunpack.c.l.b16 %v765
    %v1354 = vunpack.c.h.b16 %v765
    %v1355 = vunpack.c.l.b16 %v766
    %v1356 = vunpack.c.h.b16 %v766
    %v1357 = vunpack.c.l.b16 %v767
    %v1358 = vunpack.c.h.b16 %v767
    %v1359 = vunpack.c.l.b16 %v768
    %v1360 = vunpack.c.h.b16 %v768
    %v1361 = vunpack.c.l.b16 %v769
    %v1362 = vunpack.c.h.b16 %v769
    %v1363 = vunpack.c.l.b16 %v770
    %v1364 = vunpack.c.h.b16 %v770
    %v1365 = vunpack.c.l.b16 %v771
    %v1366 = vunpack.c.h.b16 %v771
    %v1367 = vunpack.c.l.b16 %v772
    %v1368 = vunpack.c.h.b16 %v772
    %v1369 = vunpack.c.l.b16 %v773
    %v1370 = vunpack.c.h.b16 %v773
    %v1371 = vunpack.c.l.b16 %v774
    %v1372 = vunpack.c.h.b16 %v774
    %v1373 = vunpack.c.l.b16 %v775
    %v1374 = vunpack.c.h.b16 %v775
    %v1375 = vunpack.c.l.b16 %v776
    %v1376 = vunpack.c.h.b16 %v776
    %v1377 = vunpack.c.l.b16 %v777
    %v1378 = vunpack.c.h.b16 %v777
    %v1379 = vunpack.c.l.b16 %v778
    %v1380 = vunpack.c.h.b16 %v778
    %v1381 = vunpack.c.l.b16 %v779
    %v1382 = vunpack.c.h.b16 %v779
    %v1383 = vunpack.c.l.b16 %v780
    %v1384 = vunpack.c.h.b16 %v780
    %v1385 = vunpack.c.l.b16 %v781
    %v1386 = vunpack.c.h.b16 %v781
    %v1387 = vunpack.c.l.b16 %v782
    %v1388 = vunpack.c.h.b16 %v782
    %v1389 = vunpack.c.l.b16 %v783
    %v1390 = vunpack.c.h.b16 %v783
    %v1391 = vunpack.c.l.b16 %v784
    %v1392 = vunpack.c.h.b16 %v784
    %v1393 = vunpack.c.l.b16 %v785
    %v1394 = vunpack.c.h.b16 %v785
    %v1395 = vunpack.c.l.b16 %v786
    %v1396 = vunpack.c.h.b16 %v786
    %v1397 = vunpack.c.l.b16 %v787
    %v1398 = vunpack.c.h.b16 %v787
    %v1399 = vunpack.c.l.b16 %v788
    %v1400 = vunpack.c.h.b16 %v788
    %v1401 = vunpack.c.l.b16 %v789
    %v1402 = vunpack.c.h.b16 %v789
    %v1403 = vunpack.c.l.b16 %v790
    %v1404 = vunpack.c.h.b16 %v790
    %v1405 = vunpack.c.l.b16 %v791
    %v1406 = vunpack.c.h.b16 %v791
    %v1407 = vunpack.c.l.b16 %v792
    %v1408 = vunpack.c.h.b16 %v792
    %v1409 = vunpack.c.l.b16 %v793
    %v1410 = vunpack.c.h.b16 %v793
    %v1411 = vunpack.c.l.b16 %v794
    %v1412 = vunpack.c.h.b16 %v794
    %v1413 = vunpack.c.l.b16 %v795
    %v1414 = vunpack.c.h.b16 %v795
    %v1415 = vunpack.c.l.b16 %v796
    %v1416 = vunpack.c.h.b16 %v796
    %v1417 = vunpack.c.l.b16 %v797
    %v1418 = vunpack.c.h.b16 %v797
    %v1419 = vunpack.c.l.b16 %v798
    %v1420 = vunpack.c.h.b16 %v798
    %v1421 = vunpack.c.l.b16 %v799
    %v1422 = vunpack.c.h.b16 %v799
    %v1423 = vunpack.c.l.b16 %v800
    %v1424 = vunpack.c.h.b16 %v800
    %v1425 = vunpack.c.l.b16 %v801
    %v1426 = vunpack.c.h.b16 %v801
    %v1427 = vunpack.c.l.b16 %v802
    %v1428 = vunpack.c.h.b16 %v802
    %v1429 = vunpack.c.l.b16 %v803
    %v1430 = vunpack.c.h.b16 %v803
    %v1431 = vunpack.c.l.b16 %v804
    %v1432 = vunpack.c.h.b16 %v804
    %v1433 = vunpack.c.l.b16 %v805
    %v1434 = vunpack.c.h.b16 %v805
    %v1435 = vunpack.c.l.b16 %v806
    %v1436 = vunpack.c.h.b16 %v806
    %v1437 = vunpack.c.l.b16 %v807
    %v1438 = vunpack.c.h.b16 %v807
    %v1439 = vunpack.c.l.b16 %v808
    %v1440 = vunpack.c.h.b16 %v808
    %v1441 = vunpack.c.l.b16 %v809
    %v1442 = vunpack.c.h.b16 %v809
    %v1443 = vunpack.c.l.b16 %v810
    %v1444 = vunpack.c.h.b16 %v810
    %v1445 = vunpack.c.l.b16 %v811
    %v1446 = vunpack.c.h.b16 %v811
    %v1447 = vunpack.c.l.b16 %v812
    %v1448 = vunpack.c.h.b16 %v812
    %v1449 = vunpack.c.l.b16 %v813
    %v1450 = vunpack.c.h.b16 %v813
    %v1451 = vunpack.c.l.b16 %v814
    %v1452 = vunpack.c.h.b16 %v814
    %v1453 = vunpack.c.l.b16 %v815
    %v1454 = vunpack.c.h.b16 %v815
    %v1455 = vunpack.c.l.b16 %v816
    %v1456 = vunpack.c.h.b16 %v816
    %v1457 = vunpack.c.l.b16 %v817
    %v1458 = vunpack.c.h.b16 %v817
    %v1459 = vunpack.c.l.b16 %v818
    %v1460 = vunpack.c.h.b16 %v818
    %v1461 = vunpack.c.l.b16 %v819
    %v1462 = vunpack.c.h.b16 %v819
    %v1463 = vunpack.c.l.b16 %v820
    %v1464 = vunpack.c.h.b16 %v820
    %v1465 = vunpack.c.l.b16 %v821
    %v1466 = vunpack.c.h.b16 %v821
    %v1467 = vunpack.c.l.b16 %v822
    %v1468 = vunpack.c.h.b16 %v822
    %v1469 = vunpack.c.l.b16 %v823
    %v1470 = vunpack.c.h.b16 %v823
    %v1471 = vunpack.c.l.b16 %v824
    %v1472 = vunpack.c.h.b16 %v824
    %v1473 = vunpack.c.l.b16 %v825
    %v1474 = vunpack.c.h.b16 %v825
    %v1475 = vunpack.c.l.b16 %v826
    %v1476 = vunpack.c.h.b16 %v826
    %v1477 = vunpack.c.l.b16 %v827
    %v1478 = vunpack.c.h.b16 %v827
    %v1479 = vunpack.c.l.b16 %v828
    %v1480 = vunpack.c.h.b16 %v828
    %v1481 = vunpack.c.l.b16 %v829
    %v1482 = vunpack.c.h.b16 %v829
    %v1483 = vunpack.c.l.b16 %v830
    %v1484 = vunpack.c.h.b16 %v830
    %v1485 = vunpack.c.l.b16 %v831
    %v1486 = vunpack.c.h.b16 %v831
    %v1487 = vunpack.c.l.b16 %v832
    %v1488 = vunpack.c.h.b16 %v832
    %v1489 = vunpack.c.l.b16 %v833
    %v1490 = vunpack.c.h.b16 %v833
    %v1491 = vunpack.c.l.b16 %v834
    %v1492 = vunpack.c.h.b16 %v834
    %v1493 = vunpack.c.l.b16 %v835
    %v1494 = vunpack.c.h.b16 %v835
    %v1495 = vunpack.c.l.b16 %v836
    %v1496 = vunpack.c.h.b16 %v836
    %v1497 = vunpack.c.l.b16 %v837
    %v1498 = vunpack.c.h.b16 %v837
    %v1499 = vunpack.c.l.b16 %v838
    %v1500 = vunpack.c.h.b16 %v838
    %v1501 = vunpack.c.l.b16 %v839
    %v1502 = vunpack.c.h.b16 %v839
    %v1503 = vunpack.c.l.b16 %v840
    %v1504 = vunpack.c.h.b16 %v840
    %v1505 = vunpack.c.l.b16 %v841
    %v1506 = vunpack.c.h.b16 %v841
    %v1507 = vunpack.c.l.b16 %v842
    %v1508 = vunpack.c.h.b16 %v842
    %v1509 = vunpack.c.l.b16 %v843
    %v1510 = vunpack.c.h.b16 %v843
    %v1511 = vunpack.c.l.b16 %v844
    %v1512 = vunpack.c.h.b16 %v844
    %v1513 = vunpack.c.l.b16 %v845
    %v1514 = vunpack.c.h.b16 %v845
    %v1515 = vunpack.c.l.b16 %v846
    %v1516 = vunpack.c.h.b16 %v846
    %v1517 = vunpack.c.l.b16 %v847
    %v1518 = vunpack.c.h.b16 %v847
    %v1519 = vunpack.c.l.b16 %v848
    %v1520 = vunpack.c.h.b16 %v848
    %v1521 = vunpack.c.l.b16 %v849
    %v1522 = vunpack.c.h.b16 %v849
    %v1523 = vunpack.c.l.b16 %v850
    %v1524 = vunpack.c.h.b16 %v850
    %v1525 = vunpack.c.l.b16 %v851
    %v1526 = vunpack.c.h.b16 %v851
    %v1527 = vunpack.c.l.b16 %v852
    %v1528 = vunpack.c.h.b16 %v852
    %v1529 = vunpack.c.l.b16 %v853
    %v1530 = vunpack.c.h.b16 %v853
    %v1531 = vunpack.c.l.b16 %v854
    %v1532 = vunpack.c.h.b16 %v854
    %v1533 = vunpack.c.l.b16 %v855
    %v1534 = vunpack.c.h.b16 %v855
    %v1535 = vunpack.c.l.b16 %v856
    %v1536 = vunpack.c.h.b16 %v856
    %v1537 = vunpack.c.l.b16 %v857
    %v1538 = vunpack.c.h.b16 %v857
    %v1539 = vunpack.c.l.b16 %v858
    %v1540 = vunpack.c.h.b16 %v858
    %v1541 = vunpack.c.l.b16 %v859
    %v1542 = vunpack.c.h.b16 %v859
    %v1543 = vunpack.c.l.b16 %v860
    %v1544 = vunpack.c.h.b16 %v860
    %v1545 = vunpack.c.l.b16 %v861
    %v1546 = vunpack.c.h.b16 %v861
    %v1547 = vunpack.c.l.b16 %v862
    %v1548 = vunpack.c.h.b16 %v862
    %v1549 = vunpack.c.l.b16 %v863
    %v1550 = vunpack.c.h.b16 %v863
    %v1551 = vunpack.c.l.b16 %v864
    %v1552 = vunpack.c.h.b16 %v864
    %v1553 = vunpack.c.l.b16 %v865
    %v1554 = vunpack.c.h.b16 %v865
    %v1555 = vunpack.c.l.b16 %v866
    %v1556 = vunpack.c.h.b16 %v866
    %v1557 = vunpack.c.l.b16 %v867
    %v1558 = vunpack.c.h.b16 %v867
    %v1559 = vunpack.c.l.b16 %v868
    %v1560 = vunpack.c.h.b16 %v868
    %v1561 = vunpack.c.l.b16 %v869
    %v1562 = vunpack.c.h.b16 %v869
    %v1563 = vunpack.c.l.b16 %v870
    %v1564 = vunpack.c.h.b16 %v870
    %v1565 = vunpack.c.l.b16 %v871
    %v1566 = vunpack.c.h.b16 %v871
    %v1567 = vunpack.c.l.b16 %v872
    %v1568 = vunpack.c.h.b16 %v872
    %v1569 = vunpack.c.l.b16 %v873
    %v1570 = vunpack.c.h.b16 %v873
    %v1571 = vunpack.c.l.b16 %v874
    %v1572 = vunpack.c.h.b16 %v874
    %v1573 = vunpack.c.l.b16 %v875
    %v1574 = vunpack.c.h.b16 %v875
    %v1575 = vunpack.c.l.b16 %v876
    %v1576 = vunpack.c.h.b16 %v876
    %v1577 = vunpack.c.l.b16 %v877
    %v1578 = vunpack.c.h.b16 %v877
    %v1579 = vunpack.c.l.b16 %v878
    %v1580 = vunpack.c.h.b16 %v878
    %v1581 = vunpack.c.l.b16 %v879
    %v1582 = vunpack.c.h.b16 %v879
    %v1583 = vunpack.c.l.b16 %v880
    %v1584 = vunpack.c.h.b16 %v880
    %v1585 = vunpack.c.l.b16 %v881
    %v1586 = vunpack.c.h.b16 %v881
    %v1587 = vunpack.c.l.b16 %v882
    %v1588 = vunpack.c.h.b16 %v882
    %v1589 = vunpack.c.l.b16 %v883
    %v1590 = vunpack.c.h.b16 %v883
    %v1591 = vunpack.c.l.b16 %v884
    %v1592 = vunpack.c.h.b16 %v884
    %v1593 = vunpack.c.l.b16 %v885
    %v1594 = vunpack.c.h.b16 %v885
    %v1595 = vunpack.c.l.b16 %v886
    %v1596 = vunpack.c.h.b16 %v886
    %v1597 = vunpack.c.l.b16 %v887
    %v1598 = vunpack.c.h.b16 %v887
    %v1599 = vunpack.c.l.b16 %v888
    %v1600 = vunpack.c.h.b16 %v888
    %v1601 = vunpack.c.l.b16 %v889
    %v1602 = vunpack.c.h.b16 %v889
    %v1603 = vunpack.c.l.b16 %v890
    %v1604 = vunpack.c.h.b16 %v890
    %v1605 = vunpack.c.l.b16 %v891
    %v1606 = vunpack.c.h.b16 %v891
    %v1607 = vunpack.c.l.b16 %v892
    %v1608 = vunpack.c.h.b16 %v892
    %v1609 = vunpack.c.l.b16 %v893
    %v1610 = vunpack.c.h.b16 %v893
    %v1611 = vunpack.c.l.b16 %v894
    %v1612 = vunpack.c.h.b16 %v894
    %v1613 = vunpack.c.l.b16 %v895
    %v1614 = vunpack.c.h.b16 %v895
    %v1615 = vunpack.c.l.b16 %v896
    %v1616 = vunpack.c.h.b16 %v896
    %v1617 = vunpack.c.l.b16 %v897
    %v1618 = vunpack.c.h.b16 %v897
    %v1619 = vunpack.c.l.b16 %v898
    %v1620 = vunpack.c.h.b16 %v898
    %v1621 = vunpack.c.l.b16 %v899
    %v1622 = vunpack.c.h.b16 %v899
    %v1623 = vunpack.c.l.b16 %v900
    %v1624 = vunpack.c.h.b16 %v900
    %v1625 = vunpack.c.l.b16 %v901
    %v1626 = vunpack.c.h.b16 %v901
    %v1627 = vunpack.c.l.b16 %v902
    %v1628 = vunpack.c.h.b16 %v902
    %v1629 = vunpack.c.l.b16 %v903
    %v1630 = vunpack.c.h.b16 %v903
    %v1631 = vunpack.c.l.b16 %v904
    %v1632 = vunpack.c.h.b16 %v904
    %v1633 = vunpack.c.l.b16 %v905
    %v1634 = vunpack.c.h.b16 %v905
    %v1635 = vunpack.c.l.b16 %v906
    %v1636 = vunpack.c.h.b16 %v906
    %v1637 = vunpack.c.l.b16 %v907
    %v1638 = vunpack.c.h.b16 %v907
    %v1639 = vunpack.c.l.b16 %v908
    %v1640 = vunpack.c.h.b16 %v908
    %v1641 = vunpack.c.l.b16 %v909
    %v1642 = vunpack.c.h.b16 %v909
    %v1643 = vunpack.c.l.b16 %v910
    %v1644 = vunpack.c.h.b16 %v910
    %v1645 = vunpack.c.l.b16 %v911
    %v1646 = vunpack.c.h.b16 %v911
    %v1647 = vunpack.c.l.b16 %v912
    %v1648 = vunpack.c.h.b16 %v912
    %v1649 = vunpack.c.l.b16 %v913
    %v1650 = vunpack.c.h.b16 %v913
    %v1651 = vunpack.c.l.b16 %v914
    %v1652 = vunpack.c.h.b16 %v914
    %v1653 = vunpack.c.l.b16 %v915
    %v1654 = vunpack.c.h.b16 %v915
    %v1655 = vunpack.c.l.b16 %v916
    %v1656 = vunpack.c.h.b16 %v916
    %v1657 = vunpack.c.l.b16 %v917
    %v1658 = vunpack.c.h.b16 %v917
    %v1659 = vunpack.c.l.b16 %v918
    %v1660 = vunpack.c.h.b16 %v918
    %v1661 = vunpack.c.l.b16 %v919
    %v1662 = vunpack.c.h.b16 %v919
    %v1663 = vunpack.c.l.b16 %v920
    %v1664 = vunpack.c.h.b16 %v920
    %v1665 = vunpack.c.l.b16 %v921
    %v1666 = vunpack.c.h.b16 %v921
    %v1667 = vunpack.c.l.b16 %v922
    %v1668 = vunpack.c.h.b16 %v922
    %v1669 = vunpack.c.l.b16 %v923
    %v1670 = vunpack.c.h.b16 %v923
    %v1671 = vunpack.c.l.b16 %v924
    %v1672 = vunpack.c.h.b16 %v924
    %v1673 = vunpack.c.l.b16 %v925
    %v1674 = vunpack.c.h.b16 %v925
    %v1675 = vunpack.c.l.b16 %v926
    %v1676 = vunpack.c.h.b16 %v926
    %v1677 = vunpack.c.l.b16 %v927
    %v1678 = vunpack.c.h.b16 %v927
    %v1679 = vunpack.c.l.b16 %v928
    %v1680 = vunpack.c.h.b16 %v928
    %v1681 = vunpack.c.l.b16 %v929
    %v1682 = vunpack.c.h.b16 %v929
    %v1683 = vunpack.c.l.b16 %v930
    %v1684 = vunpack.c.h.b16 %v930
    %v1685 = vunpack.c.l.b16 %v931
    %v1686 = vunpack.c.h.b16 %v931
    %v1687 = vunpack.c.l.b16 %v932
    %v1688 = vunpack.c.h.b16 %v932
    %v1689 = vunpack.c.l.b16 %v933
    %v1690 = vunpack.c.h.b16 %v933
    %v1691 = vunpack.c.l.b16 %v934
    %v1692 = vunpack.c.h.b16 %v934
    %v1693 = vunpack.c.l.b16 %v935
    %v1694 = vunpack.c.h.b16 %v935
    %v1695 = vunpack.c.l.b16 %v936
    %v1696 = vunpack.c.h.b16 %v936
    %v1697 = vunpack.c.l.b16 %v937
    %v1698 = vunpack.c.h.b16 %v937
    %v1699 = vunpack.c.l.b16 %v938
    %v1700 = vunpack.c.h.b16 %v938
    %v1701 = vunpack.c.l.b16 %v939
    %v1702 = vunpack.c.h.b16 %v939
    %v1703 = vunpack.c.l.b16 %v940
    %v1704 = vunpack.c.h.b16 %v940
    %v1705 = vunpack.c.l.b16 %v941
    %v1706 = vunpack.c.h.b16 %v941
    %v1707 = vunpack.c.l.b16 %v942
    %v1708 = vunpack.c.h.b16 %v942
    %v1709 = vunpack.c.l.b16 %v943
    %v1710 = vunpack.c.h.b16 %v943
    %v1711 = vunpack.c.l.b16 %v944
    %v1712 = vunpack.c.h.b16 %v944
    %v1713 = vunpack.c.l.b16 %v945
    %v1714 = vunpack.c.h.b16 %v945
    %v1715 = vunpack.c.l.b16 %v946
    %v1716 = vunpack.c.h.b16 %v946
    %v1717 = vunpack.c.l.b16 %v947
    %v1718 = vunpack.c.h.b16 %v947
    %v1719 = vunpack.c.l.b16 %v948
    %v1720 = vunpack.c.h.b16 %v948
    %v1721 = vunpack.c.l.b16 %v949
    %v1722 = vunpack.c.h.b16 %v949
    %v1723 = vunpack.c.l.b16 %v950
    %v1724 = vunpack.c.h.b16 %v950
    %v1725 = vunpack.c.l.b16 %v951
    %v1726 = vunpack.c.h.b16 %v951
    %v1727 = vunpack.c.l.b16 %v952
    %v1728 = vunpack.c.h.b16 %v952
    %v1729 = vunpack.c.l.b16 %v953
    %v1730 = vunpack.c.h.b16 %v953
    %v1731 = vunpack.c.l.b16 %v954
    %v1732 = vunpack.c.h.b16 %v954
    %v1733 = vunpack.c.l.b16 %v955
    %v1734 = vunpack.c.h.b16 %v955
    %v1735 = vunpack.c.l.b16 %v956
    %v1736 = vunpack.c.h.b16 %v956
    %v1737 = vunpack.c.l.b16 %v957
    %v1738 = vunpack.c.h.b16 %v957
    %v1739 = vunpack.c.l.b16 %v958
    %v1740 = vunpack.c.h.b16 %v958
    %v1741 = vunpack.c.l.b16 %v959
    %v1742 = vunpack.c.h.b16 %v959
    %v1743 = vunpack.c.l.b16 %v960
    %v1744 = vunpack.c.h.b16 %v960
    %v1745 = vunpack.c.l.b16 %v961
    %v1746 = vunpack.c.h.b16 %v961
    %v1747 = vunpack.c.l.b16 %v962
    %v1748 = vunpack.c.h.b16 %v962
    %v1749 = vunpack.c.l.b16 %v963
    %v1750 = vunpack.c.h.b16 %v963
    %v1751 = vunpack.c.l.b16 %v964
    %v1752 = vunpack.c.h.b16 %v964
    %v1753 = vunpack.c.l.b16 %v965
    %v1754 = vunpack.c.h.b16 %v965
    %v1755 = vunpack.c.l.b16 %v966
    %v1756 = vunpack.c.h.b16 %v966
    %v1757 = vpack.c.b16 %v1249, %v1245
    %v1758 = vpack.c.b16 %v1250, %v1246
    %v1759 = vpack.c.b16 %v1251, %v1247
    %v1760 = vpack.c.b16 %v1252, %v1248
    %v1761 = vpack.c.b16 %v1257, %v1253
    %v1762 = vpack.c.b16 %v1258, %v1254
    %v1763 = vpack.c.b16 %v1259, %v1255
    %v1764 = vpack.c.b16 %v1260, %v1256
    %v1765 = vpack.c.b16 %v1265, %v1261
    %v1766 = vpack.c.b16 %v1266, %v1262
    %v1767 = vpack.c.b16 %v1267, %v1263
    %v1768 = vpack.c.b16 %v1268, %v1264
    %v1769 = vpack.c.b16 %v1273, %v1269
    %v1770 = vpack.c.b16 %v1274, %v1270
    %v1771 = vpack.c.b16 %v1275, %v1271
    %v1772 = vpack.c.b16 %v1276, %v1272
    %v1773 = vpack.c.b16 %v1281, %v1277
    %v1774 = vpack.c.b16 %v1282, %v1278
    %v1775 = vpack.c.b16 %v1283, %v1279
    %v1776 = vpack.c.b16 %v1284, %v1280
    %v1777 = vpack.c.b16 %v1289, %v1285
    %v1778 = vpack.c.b16 %v1290, %v1286
    %v1779 = vpack.c.b16 %v1291, %v1287
    %v1780 = vpack.c.b16 %v1292, %v1288
    %v1781 = vpack.c.b16 %v1297, %v1293
    %v1782 = vpack.c.b16 %v1298, %v1294
    %v1783 = vpack.c.b16 %v1299, %v1295
    %v1784 = vpack.c.b16 %v1300, %v1296
    %v1785 = vpack.c.b16 %v1305, %v1301
    %v1786 = vpack.c.b16 %v1306, %v1302
    %v1787 = vpack.c.b16 %v1307, %v1303
    %v1788 = vpack.c.b16 %v1308, %v1304
    %v1789 = vpack.c.b16 %v1313, %v1309
    %v1790 = vpack.c.b16 %v1314, %v1310
    %v1791 = vpack.c.b16 %v1315, %v1311
    %v1792 = vpack.c.b16 %v1316, %v1312
    %v1793 = vpack.c.b16 %v1321, %v1317
    %v1794 = vpack.c.b16 %v1322, %v1318
    %v1795 = vpack.c.b16 %v1323, %v1319
    %v1796 = vpack.c.b16 %v1324, %v1320
    %v1797 = vpack.c.b16 %v1329, %v1325
    %v1798 = vpack.c.b16 %v1330, %v1326
    %v1799 = vpack.c.b16 %v1331, %v1327
    %v1800 = vpack.c.b16 %v1332, %v1328
    %v1801 = vpack.c.b16 %v1337, %v1333
    %v1802 = vpack.c.b16 %v1338, %v1334
    %v1803 = vpack.c.b16 %v1339, %v1335
    %v1804 = vpack.c.b16 %v1340, %v1336
    %v1805 = vpack.c.b16 %v1345, %v1341
    %v1806 = vpack.c.b16 %v1346, %v1342
    %v1807 = vpack.c.b16 %v1347, %v1343
    %v1808 = vpack.c.b16 %v1348, %v1344
    %v1809 = vpack.c.b16 %v1353, %v1349
    %v1810 = vpack.c.b16 %v1354, %v1350
    %v1811 = vpack.c.b16 %v1355, %v1351
    %v1812 = vpack.c.b16 %v1356, %v1352
    %v1813 = vpack.c.b16 %v1361, %v1357
    %v1814 = vpack.c.b16 %v1362, %v1358
    %v1815 = vpack.c.b16 %v1363, %v1359
    %v1816 = vpack.c.b16 %v1364, %v1360
    %v1817 = vpack.c.b16 %v1369, %v1365
    %v1818 = vpack.c.b16 %v1370, %v1366
    %v1819 = vpack.c.b16 %v1371, %v1367
    %v1820 = vpack.c.b16 %v1372, %v1368
    %v1821 = vpack.c.b16 %v1377, %v1373
    %v1822 = vpack.c.b16 %v1378, %v1374
    %v1823 = vpack.c.b16 %v1379, %v1375
    %v1824 = vpack.c.b16 %v1380, %v1376
    %v1825 = vpack.c.b16 %v1385, %v1381
    %v1826 = vpack.c.b16 %v1386, %v1382
    %v1827 = vpack.c.b16 %v1387, %v1383
    %v1828 = vpack.c.b16 %v1388, %v1384
    %v1829 = vpack.c.b16 %v1393, %v1389
    %v1830 = vpack.c.b16 %v1394, %v1390
    %v1831 = vpack.c.b16 %v1395, %v1391
    %v1832 = vpack.c.b16 %v1396, %v1392
    %v1833 = vpack.c.b16 %v1401, %v1397
    %v1834 = vpack.c.b16 %v1402, %v1398
    %v1835 = vpack.c.b16 %v1403, %v1399
    %v1836 = vpack.c.b16 %v1404, %v1400
    %v1837 = vpack.c.b16 %v1409, %v1405
    %v1838 = vpack.c.b16 %v1410, %v1406
    %v1839 = vpack.c.b16 %v1411, %v1407
    %v1840 = vpack.c.b16 %v1412, %v1408
    %v1841 = vpack.c.b16 %v1417, %v1413
    %v1842 = vpack.c.b16 %v1418, %v1414
    %v1843 = vpack.c.b16 %v1419, %v1415
    %v1844 = vpack.c.b16 %v1420, %v1416
    %v1845 = vpack.c.b16 %v1425, %v1421
    %v1846 = vpack.c.b16 %v1426, %v1422
    %v1847 = vpack.c.b16 %v1427, %v1423
    %v1848 = vpack.c.b16 %v1428, %v1424
    %v1849 = vpack.c.b16 %v1433, %v1429
    %v1850 = vpack.c.b16 %v1434, %v1430
    %v1851 = vpack.c.b16 %v1435, %v1431
    %v1852 = vpack.c.b16 %v1436, %v1432
    %v1853 = vpack.c.b16 %v1441, %v1437
    %v1854 = vpack.c.b16 %v1442, %v1438
    %v1855 = vpack.c.b16 %v1443, %v1439
    %v1856 = vpack.c.b16 %v1444, %v1440
    %v1857 = vpack.c.b16 %v1449, %v1445
    %v1858 = vpack.c.b16 %v1450, %v1446
    %v1859 = vpack.c.b16 %v1451, %v1447
    %v1860 = vpack.c.b16 %v1452, %v1448
    %v1861 = vpack.c.b16 %v1457, %v1453
    %v1862 = vpack.c.b16 %v1458, %v1454
    %v1863 = vpack.c.b16 %v1459, %v1455
    %v1864 = vpack.c.b16 %v1460, %v1456
    %v1865 = vpack.c.b16 %v1465, %v1461
    %v1866 = vpack.c.b16 %v1466, %v1462
    %v1867 = vpack.c.b16 %v1467, %v1463
    %v1868 = vpack.c.b16 %v1468, %v1464
    %v1869 = vpack.c.b16 %v1473, %v1469
    %v1870 = vpack.c.b16 %v1474, %v1470
    %v1871 = vpack.c.b16 %v1475, %v1471
    %v1872 = vpack.c.b16 %v1476, %v1472
    %v1873 = vpack.c.b16 %v1481, %v1477
    %v1874 = vpack.c.b16 %v1482, %v1478
    %v1875 = vpack.c.b16 %v1483, %v1479
    %v1876 = vpack.c.b16 %v1484, %v1480
    %v1877 = vpack.c.b16 %v1489, %v1485
    %v1878 = vpack.c.b16 %v1490, %v1486
    %v1879 = vpack.c.b16 %v1491, %v1487
    %v1880 = vpack.c.b16 %v1492, %v1488
    %v1881 = vpack.c.b16 %v1497, %v1493
    %v1882 = vpack.c.b16 %v1498, %v1494
    %v1883 = vpack.c.b16 %v1499, %v1495
    %v1884 = vpack.c.b16 %v1500, %v1496
    %v1885 = vpack.c.b16 %v1505, %v1501
    %v1886 = vpack.c.b16 %v1506, %v1502
    %v1887 = vpack.c.b16 %v1507, %v1503
    %v1888 = vpack.c.b16 %v1508, %v1504
    %v1889 = vpack.c.b16 %v1513, %v1509
    %v1890 = vpack.c.b16 %v1514, %v1510
    %v1891 = vpack.c.b16 %v1515, %v1511
    %v1892 = vpack.c.b16 %v1516, %v1512
    %v1893 = vpack.c.b16 %v1521, %v1517
    %v1894 = vpack.c.b16 %v1522, %v1518
    %v1895 = vpack.c.b16 %v1523, %v1519
    %v1896 = vpack.c.b16 %v1524, %v1520
    %v1897 = vpack.c.b16 %v1529, %v1525
    %v1898 = vpack.c.b16 %v1530, %v1526
    %v1899 = vpack.c.b16 %v1531, %v1527
    %v1900 = vpack.c.b16 %v1532, %v1528
    %v1901 = vpack.c.b16 %v1537, %v1533
    %v1902 = vpack.c.b16 %v1538, %v1534
    %v1903 = vpack.c.b16 %v1539, %v1535
    %v1904 = vpack.c.b16 %v1540, %v1536
    %v1905 = vpack.c.b16 %v1545, %v1541
    %v1906 = vpack.c.b16 %v1546, %v1542
    %v1907 = vpack.c.b16 %v1547, %v1543
    %v1908 = vpack.c.b16 %v1548, %v1544
    %v1909 = vpack.c.b16 %v1553, %v1549
    %v1910 = vpack.c.b16 %v1554, %v1550
    %v1911 = vpack.c.b16 %v1555, %v1551
    %v1912 = vpack.c.b16 %v1556, %v1552
    %v1913 = vpack.c.b16 %v1561, %v1557
    %v1914 = vpack.c.b16 %v1562, %v1558
    %v1915 = vpack.c.b16 %v1563, %v1559
    %v1916 = vpack.c.b16 %v1564, %v1560
    %v1917 = vpack.c.b16 %v1569, %v1565
    %v1918 = vpack.c.b16 %v1570, %v1566
    %v1919 = vpack.c.b16 %v1571, %v1567
    %v1920 = vpack.c.b16 %v1572, %v1568
    %v1921 = vpack.c.b16 %v1577, %v1573
    %v1922 = vpack.c.b16 %v1578, %v1574
    %v1923 = vpack.c.b16 %v1579, %v1575
    %v1924 = vpack.c.b16 %v1580, %v1576
    %v1925 = vpack.c.b16 %v1585, %v1581
    %v1926 = vpack.c.b16 %v1586, %v1582
    %v1927 = vpack.c.b16 %v1587, %v1583
    %v1928 = vpack.c.b16 %v1588, %v1584
    %v1929 = vpack.c.b16 %v1593, %v1589
    %v1930 = vpack.c.b16 %v1594, %v1590
    %v1931 = vpack.c.b16 %v1595, %v1591
    %v1932 = vpack.c.b16 %v1596, %v1592
    %v1933 = vpack.c.b16 %v1601, %v1597
    %v1934 = vpack.c.b16 %v1602, %v1598
    %v1935 = vpack.c.b16 %v1603, %v1599
    %v1936 = vpack.c.b16 %v1604, %v1600
    %v1937 = vpack.c.b16 %v1609, %v1605
    %v1938 = vpack.c.b16 %v1610, %v1606
    %v1939 = vpack.c.b16 %v1611, %v1607
    %v1940 = vpack.c.b16 %v1612, %v1608
    %v1941 = vpack.c.b16 %v1617, %v1613
    %v1942 = vpack.c.b16 %v1618, %v1614
    %v1943 = vpack.c.b16 %v1619, %v1615
    %v1944 = vpack.c.b16 %v1620, %v1616
    %v1945 = vpack.c.b16 %v1625, %v1621
    %v1946 = vpack.c.b16 %v1626, %v1622
    %v1947 = vpack.c.b16 %v1627, %v1623
    %v1948 = vpack.c.b16 %v1628, %v1624
    %v1949 = vpack.c.b16 %v1633, %v1629
    %v1950 = vpack.c.b16 %v1634, %v1630
    %v1951 = vpack.c.b16 %v1635, %v1631
    %v1952 = vpack.c.b16 %v1636, %v1632
    %v1953 = vpack.c.b16 %v1641, %v1637
    %v1954 = vpack.c.b16 %v1642, %v1638
    %v1955 = vpack.c.b16 %v1643, %v1639
    %v1956 = vpack.c.b16 %v1644, %v1640
    %v1957 = vpack.c.b16 %v1649, %v1645
    %v1958 = vpack.c.b16 %v1650, %v1646
    %v1959 = vpack.c.b16 %v1651, %v1647
    %v1960 = vpack.c.b16 %v1652, %v1648
    %v1961 = vpack.c.b16 %v1657, %v1653
    %v1962 = vpack.c.b16 %v1658, %v1654
    %v1963 = vpack.c.b16 %v1659, %v1655
    %v1964 = vpack.c.b16 %v1660, %v1656
    %v1965 = vpack.c.b16 %v1665, %v1661
    %v1966 = vpack.c.b16 %v1666, %v1662
    %v1967 = vpack.c.b16 %v1667, %v1663
    %v1968 = vpack.c.b16 %v1668, %v1664
    %v1969 = vpack.c.b16 %v1673, %v1669
    %v1970 = vpack.c.b16 %v1674, %v1670
    %v1971 = vpack.c.b16 %v1675, %v1671
    %v1972 = vpack.c.b16 %v1676, %v1672
    %v1973 = vpack.c.b16 %v1681, %v1677
    %v1974 = vpack.c.b16 %v1682, %v1678
    %v1975 = vpack.c.b16 %v1683, %v1679
    %v1976 = vpack.c.b16 %v1684, %v1680
    %v1977 = vpack.c.b16 %v1689, %v1685
    %v1978 = vpack.c.b16 %v1690, %v1686
    %v1979 = vpack.c.b16 %v1691, %v1687
    %v1980 = vpack.c.b16 %v1692, %v1688
    %v1981 = vpack.c.b16 %v1697, %v1693
    %v1982 = vpack.c.b16 %v1698, %v1694
    %v1983 = vpack.c.b16 %v1699, %v1695
    %v1984 = vpack.c.b16 %v1700, %v1696
    %v1985 = vpack.c.b16 %v1705, %v1701
    %v1986 = vpack.c.b16 %v1706, %v1702
    %v1987 = vpack.c.b16 %v1707, %v1703
    %v1988 = vpack.c.b16 %v1708, %v1704
    %v1989 = vpack.c.b16 %v1713, %v1709
    %v1990 = vpack.c.b16 %v1714, %v1710
    %v1991 = vpack.c.b16 %v1715, %v1711
    %v1992 = vpack.c.b16 %v1716, %v1712
    %v1993 = vpack.c.b16 %v1721, %v1717
    %v1994 = vpack.c.b16 %v1722, %v1718
    %v1995 = vpack.c.b16 %v1723, %v1719
    %v1996 = vpack.c.b16 %v1724, %v1720
    %v1997 = vpack.c.b16 %v1729, %v1725
    %v1998 = vpack.c.b16 %v1730, %v1726
    %v1999 = vpack.c.b16 %v1731, %v1727
    %v2000 = vpack.c.b16 %v1732, %v1728
    %v2001 = vpack.c.b16 %v1737, %v1733
    %v2002 = vpack.c.b16 %v1738, %v1734
    %v2003 = vpack.c.b16 %v1739, %v1735
    %v2004 = vpack.c.b16 %v1740, %v1736
    %v2005 = vpack.c.b16 %v1745, %v1741
    %v2006 = vpack.c.b16 %v1746, %v1742
    %v2007 = vpack.c.b16 %v1747, %v1743
    %v2008 = vpack.c.b16 %v1748, %v1744
    %v2009 = vpack.c.b16 %v1753, %v1749
    %v2010 = vpack.c.b16 %v1754, %v1750
    %v2011 = vpack.c.b16 %v1755, %v1751
    %v2012 = vpack.c.b16 %v1756, %v1752
    %2269 = vmatprep.subr.bf16.mxu0 %v1758
    %2270 = vmatpush1.bf16.msra.mxu0 %v1757
    %2271 = vmatprep.subr.bf16.mxu0 %v1762
    %2272 = vmatpush1.bf16.msra.mxu0 %v1761
    %2273 = vmatprep.subr.bf16.mxu0 %v1766
    %2274 = vmatpush1.bf16.msra.mxu0 %v1765
    %2275 = vmatprep.subr.bf16.mxu0 %v1770
    %2276 = vmatpush1.bf16.msra.mxu0 %v1769
    %2277 = vmatprep.subr.bf16.mxu0 %v1774
    %2278 = vmatpush1.bf16.msra.mxu0 %v1773
    %2279 = vmatprep.subr.bf16.mxu0 %v1778
    %2280 = vmatpush1.bf16.msra.mxu0 %v1777
    %2281 = vmatprep.subr.bf16.mxu0 %v1782
    %2282 = vmatpush1.bf16.msra.mxu0 %v1781
    %2283 = vmatprep.subr.bf16.mxu0 %v1786
    %2284 = vmatpush1.bf16.msra.mxu0 %v1785
    %2285 = vmatprep.subr.bf16.mxu0 %v1790
    %2286 = vmatpush1.bf16.msra.mxu0 %v1789
    %2287 = vmatprep.subr.bf16.mxu0 %v1794
    %2288 = vmatpush1.bf16.msra.mxu0 %v1793
    %2289 = vmatprep.subr.bf16.mxu0 %v1798
    %2290 = vmatpush1.bf16.msra.mxu0 %v1797
    %2291 = vmatprep.subr.bf16.mxu0 %v1802
    %2292 = vmatpush1.bf16.msra.mxu0 %v1801
    %2293 = vmatprep.subr.bf16.mxu0 %v1806
    %2294 = vmatpush1.bf16.msra.mxu0 %v1805
    %2295 = vmatprep.subr.bf16.mxu0 %v1810
    %2296 = vmatpush1.bf16.msra.mxu0 %v1809
    %2297 = vmatprep.subr.bf16.mxu0 %v1814
    %2298 = vmatpush1.bf16.msra.mxu0 %v1813
    %2299 = vmatprep.subr.bf16.mxu0 %v1818
    %2300 = vmatpush1.bf16.msra.mxu0 %v1817
    %2301 = vmatprep.mubr.bf16.mxu0 %v704
    %2302 = vmatmul.mubr.bf16.gmra.mrb[0].mxu0 %v703
    %v2303 = vpop.f32.mrb[0].mxu0
    %v2304 = vadd.f32 %v972, %v2303
    %v2305 = vpop.f32.mrb[0].mxu0
    %v2306 = vadd.f32 %v976, %v2305
    %v2307 = vpop.f32.mrb[0].mxu0
    %v2308 = vpop.f32.mrb[0].mxu0
    %2309 = vdwg.mxu0
    %2310 = vmatprep.subr.bf16.mxu0 %v1822
    %2311 = vmatpush1.bf16.msra.mxu0 %v1821
    %2312 = vmatprep.subr.bf16.mxu0 %v1826
    %2313 = vmatpush1.bf16.msra.mxu0 %v1825
    %2314 = vmatprep.subr.bf16.mxu0 %v1830
    %2315 = vmatpush1.bf16.msra.mxu0 %v1829
    %2316 = vmatprep.subr.bf16.mxu0 %v1834
    %2317 = vmatpush1.bf16.msra.mxu0 %v1833
    %2318 = vmatprep.subr.bf16.mxu0 %v1838
    %2319 = vmatpush1.bf16.msra.mxu0 %v1837
    %2320 = vmatprep.subr.bf16.mxu0 %v1842
    %2321 = vmatpush1.bf16.msra.mxu0 %v1841
    %2322 = vmatprep.subr.bf16.mxu0 %v1846
    %2323 = vmatpush1.bf16.msra.mxu0 %v1845
    %2324 = vmatprep.subr.bf16.mxu0 %v1850
    %2325 = vmatpush1.bf16.msra.mxu0 %v1849
    %2326 = vmatprep.subr.bf16.mxu0 %v1854
    %2327 = vmatpush1.bf16.msra.mxu0 %v1853
    %2328 = vmatprep.subr.bf16.mxu0 %v1858
    %2329 = vmatpush1.bf16.msra.mxu0 %v1857
    %2330 = vmatprep.subr.bf16.mxu0 %v1862
    %2331 = vmatpush1.bf16.msra.mxu0 %v1861
    %2332 = vmatprep.subr.bf16.mxu0 %v1866
    %2333 = vmatpush1.bf16.msra.mxu0 %v1865
    %2334 = vmatprep.subr.bf16.mxu0 %v1870
    %2335 = vmatpush1.bf16.msra.mxu0 %v1869
    %2336 = vmatprep.subr.bf16.mxu0 %v1874
    %2337 = vmatpush1.bf16.msra.mxu0 %v1873
    %2338 = vmatprep.subr.bf16.mxu0 %v1878
    %2339 = vmatpush1.bf16.msra.mxu0 %v1877
    %2340 = vmatprep.subr.bf16.mxu0 %v1882
    %2341 = vmatpush1.bf16.msra.mxu0 %v1881
    %2342 = vmatprep.mubr.bf16.mxu0 %v706
    %2343 = vmatmul.mubr.bf16.gmra.mrb[0].mxu0 %v705
    %v2344 = vpop.f32.mrb[0].mxu0
    %v2345 = vadd.f32 %v2304, %v2344
    %v2346 = vpop.f32.mrb[0].mxu0
    %v2347 = vadd.f32 %v2306, %v2346
    %v2348 = vpop.f32.mrb[0].mxu0
    %v2349 = vpop.f32.mrb[0].mxu0
    %2350 = vdwg.mxu0
    %2351 = vmatprep.subr.bf16.mxu0 %v1886
    %2352 = vmatpush1.bf16.msra.mxu0 %v1885
    %2353 = vmatprep.subr.bf16.mxu0 %v1890
    %2354 = vmatpush1.bf16.msra.mxu0 %v1889
    %2355 = vmatprep.subr.bf16.mxu0 %v1894
    %2356 = vmatpush1.bf16.msra.mxu0 %v1893
    %2357 = vmatprep.subr.bf16.mxu0 %v1898
    %2358 = vmatpush1.bf16.msra.mxu0 %v1897
    %2359 = vmatprep.subr.bf16.mxu0 %v1902
    %2360 = vmatpush1.bf16.msra.mxu0 %v1901
    %2361 = vmatprep.subr.bf16.mxu0 %v1906
    %2362 = vmatpush1.bf16.msra.mxu0 %v1905
    %2363 = vmatprep.subr.bf16.mxu0 %v1910
    %2364 = vmatpush1.bf16.msra.mxu0 %v1909
    %2365 = vmatprep.subr.bf16.mxu0 %v1914
    %2366 = vmatpush1.bf16.msra.mxu0 %v1913
    %2367 = vmatprep.subr.bf16.mxu0 %v1918
    %2368 = vmatpush1.bf16.msra.mxu0 %v1917
    %2369 = vmatprep.subr.bf16.mxu0 %v1922
    %2370 = vmatpush1.bf16.msra.mxu0 %v1921
    %2371 = vmatprep.subr.bf16.mxu0 %v1926
    %2372 = vmatpush1.bf16.msra.mxu0 %v1925
    %2373 = vmatprep.subr.bf16.mxu0 %v1930
    %2374 = vmatpush1.bf16.msra.mxu0 %v1929
    %2375 = vmatprep.subr.bf16.mxu0 %v1934
    %2376 = vmatpush1.bf16.msra.mxu0 %v1933
    %2377 = vmatprep.subr.bf16.mxu0 %v1938
    %2378 = vmatpush1.bf16.msra.mxu0 %v1937
    %2379 = vmatprep.subr.bf16.mxu0 %v1942
    %2380 = vmatpush1.bf16.msra.mxu0 %v1941
    %2381 = vmatprep.subr.bf16.mxu0 %v1946
    %2382 = vmatpush1.bf16.msra.mxu0 %v1945
    %2383 = vmatprep.mubr.bf16.mxu0 %v708
    %2384 = vmatmul.mubr.bf16.gmra.mrb[0].mxu0 %v707
    %v2385 = vpop.f32.mrb[0].mxu0
    %v2386 = vadd.f32 %v2345, %v2385
    %v2387 = vpop.f32.mrb[0].mxu0
    %v2388 = vadd.f32 %v2347, %v2387
    %v2389 = vpop.f32.mrb[0].mxu0
    %v2390 = vpop.f32.mrb[0].mxu0
    %2391 = vdwg.mxu0
    %2392 = vmatprep.subr.bf16.mxu0 %v1950
    %2393 = vmatpush1.bf16.msra.mxu0 %v1949
    %2394 = vmatprep.subr.bf16.mxu0 %v1954
    %2395 = vmatpush1.bf16.msra.mxu0 %v1953
    %2396 = vmatprep.subr.bf16.mxu0 %v1958
    %2397 = vmatpush1.bf16.msra.mxu0 %v1957
    %2398 = vmatprep.subr.bf16.mxu0 %v1962
    %2399 = vmatpush1.bf16.msra.mxu0 %v1961
    %2400 = vmatprep.subr.bf16.mxu0 %v1966
    %2401 = vmatpush1.bf16.msra.mxu0 %v1965
    %2402 = vmatprep.subr.bf16.mxu0 %v1970
    %2403 = vmatpush1.bf16.msra.mxu0 %v1969
    %2404 = vmatprep.subr.bf16.mxu0 %v1974
    %2405 = vmatpush1.bf16.msra.mxu0 %v1973
    %2406 = vmatprep.subr.bf16.mxu0 %v1978
    %2407 = vmatpush1.bf16.msra.mxu0 %v1977
    %2408 = vmatprep.subr.bf16.mxu0 %v1982
    %2409 = vmatpush1.bf16.msra.mxu0 %v1981
    %2410 = vmatprep.subr.bf16.mxu0 %v1986
    %2411 = vmatpush1.bf16.msra.mxu0 %v1985
    %2412 = vmatprep.subr.bf16.mxu0 %v1990
    %2413 = vmatpush1.bf16.msra.mxu0 %v1989
    %2414 = vmatprep.subr.bf16.mxu0 %v1994
    %2415 = vmatpush1.bf16.msra.mxu0 %v1993
    %2416 = vmatprep.subr.bf16.mxu0 %v1998
    %2417 = vmatpush1.bf16.msra.mxu0 %v1997
    %2418 = vmatprep.subr.bf16.mxu0 %v2002
    %2419 = vmatpush1.bf16.msra.mxu0 %v2001
    %2420 = vmatprep.subr.bf16.mxu0 %v2006
    %2421 = vmatpush1.bf16.msra.mxu0 %v2005
    %2422 = vmatprep.subr.bf16.mxu0 %v2010
    %2423 = vmatpush1.bf16.msra.mxu0 %v2009
    %2424 = vmatprep.mubr.bf16.mxu0 %v710
    %2425 = vmatmul.mubr.bf16.gmra.mrb[0].mxu0 %v709
    %v2426 = vpop.f32.mrb[0].mxu0
    %v2427 = vadd.f32 %v2386, %v2426
    %v2428 = vpop.f32.mrb[0].mxu0
    %v2429 = vadd.f32 %v2388, %v2428
    %v2430 = vpop.f32.mrb[0].mxu0
    %v2431 = vpop.f32.mrb[0].mxu0
    %2432 = vdwg.mxu0
    %2433 = vmatprep.subr.bf16.mxu0 %v1760
    %2434 = vmatpush1.bf16.msra.mxu0 %v1759
    %2435 = vmatprep.subr.bf16.mxu0 %v1764
    %2436 = vmatpush1.bf16.msra.mxu0 %v1763
    %2437 = vmatprep.subr.bf16.mxu0 %v1768
    %2438 = vmatpush1.bf16.msra.mxu0 %v1767
    %2439 = vmatprep.subr.bf16.mxu0 %v1772
    %2440 = vmatpush1.bf16.msra.mxu0 %v1771
    %2441 = vmatprep.subr.bf16.mxu0 %v1776
    %2442 = vmatpush1.bf16.msra.mxu0 %v1775
    %2443 = vmatprep.subr.bf16.mxu0 %v1780
    %2444 = vmatpush1.bf16.msra.mxu0 %v1779
    %2445 = vmatprep.subr.bf16.mxu0 %v1784
    %2446 = vmatpush1.bf16.msra.mxu0 %v1783
    %2447 = vmatprep.subr.bf16.mxu0 %v1788
    %2448 = vmatpush1.bf16.msra.mxu0 %v1787
    %2449 = vmatprep.subr.bf16.mxu0 %v1792
    %2450 = vmatpush1.bf16.msra.mxu0 %v1791
    %2451 = vmatprep.subr.bf16.mxu0 %v1796
    %2452 = vmatpush1.bf16.msra.mxu0 %v1795
    %2453 = vmatprep.subr.bf16.mxu0 %v1800
    %2454 = vmatpush1.bf16.msra.mxu0 %v1799
    %2455 = vmatprep.subr.bf16.mxu0 %v1804
    %2456 = vmatpush1.bf16.msra.mxu0 %v1803
    %2457 = vmatprep.subr.bf16.mxu0 %v1808
    %2458 = vmatpush1.bf16.msra.mxu0 %v1807
    %2459 = vmatprep.subr.bf16.mxu0 %v1812
    %2460 = vmatpush1.bf16.msra.mxu0 %v1811
    %2461 = vmatprep.subr.bf16.mxu0 %v1816
    %2462 = vmatpush1.bf16.msra.mxu0 %v1815
    %2463 = vmatprep.subr.bf16.mxu0 %v1820
    %2464 = vmatpush1.bf16.msra.mxu0 %v1819
    %2465 = vmatprep.mubr.bf16.mxu0 %v704
    %2466 = vmatmul.mubr.bf16.gmra.mrb[0].mxu0 %v703
    %v2467 = vpop.f32.mrb[0].mxu0
    %v2468 = vadd.f32 %v980, %v2467
    %v2469 = vpop.f32.mrb[0].mxu0
    %v2470 = vadd.f32 %v984, %v2469
    %v2471 = vpop.f32.mrb[0].mxu0
    %v2472 = vpop.f32.mrb[0].mxu0
    %2473 = vdwg.mxu0
    %2474 = vmatprep.subr.bf16.mxu0 %v1824
    %2475 = vmatpush1.bf16.msra.mxu0 %v1823
    %2476 = vmatprep.subr.bf16.mxu0 %v1828
    %2477 = vmatpush1.bf16.msra.mxu0 %v1827
    %2478 = vmatprep.subr.bf16.mxu0 %v1832
    %2479 = vmatpush1.bf16.msra.mxu0 %v1831
    %2480 = vmatprep.subr.bf16.mxu0 %v1836
    %2481 = vmatpush1.bf16.msra.mxu0 %v1835
    %2482 = vmatprep.subr.bf16.mxu0 %v1840
    %2483 = vmatpush1.bf16.msra.mxu0 %v1839
    %2484 = vmatprep.subr.bf16.mxu0 %v1844
    %2485 = vmatpush1.bf16.msra.mxu0 %v1843
    %2486 = vmatprep.subr.bf16.mxu0 %v1848
    %2487 = vmatpush1.bf16.msra.mxu0 %v1847
    %2488 = vmatprep.subr.bf16.mxu0 %v1852
    %2489 = vmatpush1.bf16.msra.mxu0 %v1851
    %2490 = vmatprep.subr.bf16.mxu0 %v1856
    %2491 = vmatpush1.bf16.msra.mxu0 %v1855
    %2492 = vmatprep.subr.bf16.mxu0 %v1860
    %2493 = vmatpush1.bf16.msra.mxu0 %v1859
    %2494 = vmatprep.subr.bf16.mxu0 %v1864
    %2495 = vmatpush1.bf16.msra.mxu0 %v1863
    %2496 = vmatprep.subr.bf16.mxu0 %v1868
    %2497 = vmatpush1.bf16.msra.mxu0 %v1867
    %2498 = vmatprep.subr.bf16.mxu0 %v1872
    %2499 = vmatpush1.bf16.msra.mxu0 %v1871
    %2500 = vmatprep.subr.bf16.mxu0 %v1876
    %2501 = vmatpush1.bf16.msra.mxu0 %v1875
    %2502 = vmatprep.subr.bf16.mxu0 %v1880
    %2503 = vmatpush1.bf16.msra.mxu0 %v1879
    %2504 = vmatprep.subr.bf16.mxu0 %v1884
    %2505 = vmatpush1.bf16.msra.mxu0 %v1883
    %2506 = vmatprep.mubr.bf16.mxu0 %v706
    %2507 = vmatmul.mubr.bf16.gmra.mrb[0].mxu0 %v705
    %v2508 = vpop.f32.mrb[0].mxu0
    %v2509 = vadd.f32 %v2468, %v2508
    %v2510 = vpop.f32.mrb[0].mxu0
    %v2511 = vadd.f32 %v2470, %v2510
    %v2512 = vpop.f32.mrb[0].mxu0
    %v2513 = vpop.f32.mrb[0].mxu0
    %2514 = vdwg.mxu0
    %2515 = vmatprep.subr.bf16.mxu0 %v1888
    %2516 = vmatpush1.bf16.msra.mxu0 %v1887
    %2517 = vmatprep.subr.bf16.mxu0 %v1892
    %2518 = vmatpush1.bf16.msra.mxu0 %v1891
    %2519 = vmatprep.subr.bf16.mxu0 %v1896
    %2520 = vmatpush1.bf16.msra.mxu0 %v1895
    %2521 = vmatprep.subr.bf16.mxu0 %v1900
    %2522 = vmatpush1.bf16.msra.mxu0 %v1899
    %2523 = vmatprep.subr.bf16.mxu0 %v1904
    %2524 = vmatpush1.bf16.msra.mxu0 %v1903
    %2525 = vmatprep.subr.bf16.mxu0 %v1908
    %2526 = vmatpush1.bf16.msra.mxu0 %v1907
    %2527 = vmatprep.subr.bf16.mxu0 %v1912
    %2528 = vmatpush1.bf16.msra.mxu0 %v1911
    %2529 = vmatprep.subr.bf16.mxu0 %v1916
    %2530 = vmatpush1.bf16.msra.mxu0 %v1915
    %2531 = vmatprep.subr.bf16.mxu0 %v1920
    %2532 = vmatpush1.bf16.msra.mxu0 %v1919
    %2533 = vmatprep.subr.bf16.mxu0 %v1924
    %2534 = vmatpush1.bf16.msra.mxu0 %v1923
    %2535 = vmatprep.subr.bf16.mxu0 %v1928
    %2536 = vmatpush1.bf16.msra.mxu0 %v1927
    %2537 = vmatprep.subr.bf16.mxu0 %v1932
    %2538 = vmatpush1.bf16.msra.mxu0 %v1931
    %2539 = vmatprep.subr.bf16.mxu0 %v1936
    %2540 = vmatpush1.bf16.msra.mxu0 %v1935
    %2541 = vmatprep.subr.bf16.mxu0 %v1940
    %2542 = vmatpush1.bf16.msra.mxu0 %v1939
    %2543 = vmatprep.subr.bf16.mxu0 %v1944
    %2544 = vmatpush1.bf16.msra.mxu0 %v1943
    %2545 = vmatprep.subr.bf16.mxu0 %v1948
    %2546 = vmatpush1.bf16.msra.mxu0 %v1947
    %2547 = vmatprep.mubr.bf16.mxu0 %v708
    %2548 = vmatmul.mubr.bf16.gmra.mrb[0].mxu0 %v707
    %v2549 = vpop.f32.mrb[0].mxu0
    %v2550 = vadd.f32 %v2509, %v2549
    %v2551 = vpop.f32.mrb[0].mxu0
    %v2552 = vadd.f32 %v2511, %v2551
    %v2553 = vpop.f32.mrb[0].mxu0
    %v2554 = vpop.f32.mrb[0].mxu0
    %2555 = vdwg.mxu0
    %2556 = vmatprep.subr.bf16.mxu0 %v1952
    %2557 = vmatpush1.bf16.msra.mxu0 %v1951
    %2558 = vmatprep.subr.bf16.mxu0 %v1956
    %2559 = vmatpush1.bf16.msra.mxu0 %v1955
    %2560 = vmatprep.subr.bf16.mxu0 %v1960
    %2561 = vmatpush1.bf16.msra.mxu0 %v1959
    %2562 = vmatprep.subr.bf16.mxu0 %v1964
    %2563 = vmatpush1.bf16.msra.mxu0 %v1963
    %2564 = vmatprep.subr.bf16.mxu0 %v1968
    %2565 = vmatpush1.bf16.msra.mxu0 %v1967
    %2566 = vmatprep.subr.bf16.mxu0 %v1972
    %2567 = vmatpush1.bf16.msra.mxu0 %v1971
    %2568 = vmatprep.subr.bf16.mxu0 %v1976
    %2569 = vmatpush1.bf16.msra.mxu0 %v1975
    %2570 = vmatprep.subr.bf16.mxu0 %v1980
    %2571 = vmatpush1.bf16.msra.mxu0 %v1979
    %2572 = vmatprep.subr.bf16.mxu0 %v1984
    %2573 = vmatpush1.bf16.msra.mxu0 %v1983
    %2574 = vmatprep.subr.bf16.mxu0 %v1988
    %2575 = vmatpush1.bf16.msra.mxu0 %v1987
    %2576 = vmatprep.subr.bf16.mxu0 %v1992
    %2577 = vmatpush1.bf16.msra.mxu0 %v1991
    %2578 = vmatprep.subr.bf16.mxu0 %v1996
    %2579 = vmatpush1.bf16.msra.mxu0 %v1995
    %2580 = vmatprep.subr.bf16.mxu0 %v2000
    %2581 = vmatpush1.bf16.msra.mxu0 %v1999
    %2582 = vmatprep.subr.bf16.mxu0 %v2004
    %2583 = vmatpush1.bf16.msra.mxu0 %v2003
    %2584 = vmatprep.subr.bf16.mxu0 %v2008
    %2585 = vmatpush1.bf16.msra.mxu0 %v2007
    %2586 = vmatprep.subr.bf16.mxu0 %v2012
    %2587 = vmatpush1.bf16.msra.mxu0 %v2011
    %2588 = vmatprep.mubr.bf16.mxu0 %v710
    %2589 = vmatmul.mubr.bf16.gmra.mrb[0].mxu0 %v709
    %v2590 = vpop.f32.mrb[0].mxu0
    %v2591 = vadd.f32 %v2550, %v2590
    %v2592 = vpop.f32.mrb[0].mxu0
    %v2593 = vadd.f32 %v2552, %v2592
    %v2594 = vpop.f32.mrb[0].mxu0
    %v2595 = vpop.f32.mrb[0].mxu0
    %2596 = vdwg.mxu0
    %vm2597 = vcmp.gt.f32.partialorder %v2427, 0.0
    %vm2598 = vcmp.gt.f32.partialorder %v2429, 0.0
    %vm2599 = vcmp.gt.f32.partialorder %v2591, 0.0
    %vm2600 = vcmp.gt.f32.partialorder %v2593, 0.0
    %v2601 = vmul.f32 %v2427, 0.01
    %v2602 = vmul.f32 %v2429, 0.01
    %v2603 = vmul.f32 %v2591, 0.01
    %v2604 = vmul.f32 %v2593, 0.01
    %v2605 = vsel %vm2597, %v2427, %v2601
    %v2606 = vsel %vm2598, %v2429, %v2602
    %v2607 = vsel %vm2599, %v2591, %v2603
    %v2608 = vsel %vm2600, %v2593, %v2604
    %v2609 = vpack.c.bf16 %v2605, %v2605
    %v2610 = vpack.c.bf16 %v2606, %v2606
    %v2611 = vpack.c.bf16 %v2607, %v2607
    %v2612 = vpack.c.bf16 %v2608, %v2608
    %v2613 = vld [vmem:[#allocation6] sm:$0xff]
    %v2614 = vld [vmem:[#allocation6 + $0x8] sm:$0xff]
    %v2615 = vld [vmem:[#allocation6 + $0x10] sm:$0xff]
    %v2616 = vld [vmem:[#allocation6 + $0x18] sm:$0xff]
    %v2617 = vld [vmem:[#allocation6 + $0x20] sm:$0xff]
    %v2618 = vld [vmem:[#allocation6 + $0x28] sm:$0xff]
    %v2619 = vld [vmem:[#allocation6 + $0x30] sm:$0xff]
    %v2620 = vld [vmem:[#allocation6 + $0x38] sm:$0xff]
    %v2621 = vld [vmem:[#allocation6 + $0x40] sm:$0xff]
    %v2622 = vld [vmem:[#allocation6 + $0x48] sm:$0xff]
    %v2623 = vld [vmem:[#allocation6 + $0x50] sm:$0xff]
    %v2624 = vld [vmem:[#allocation6 + $0x58] sm:$0xff]
    %v2625 = vld [vmem:[#allocation6 + $0x60] sm:$0xff]
    %v2626 = vld [vmem:[#allocation6 + $0x68] sm:$0xff]
    %v2627 = vld [vmem:[#allocation6 + $0x70] sm:$0xff]
    %v2628 = vld [vmem:[#allocation6 + $0x78] sm:$0xff]
    %v2629 = vld [vmem:[#allocation6 + $0x80] sm:$0xff]
    %v2630 = vld [vmem:[#allocation6 + $0x88] sm:$0xff]
    %v2631 = vld [vmem:[#allocation6 + $0x90] sm:$0xff]
    %v2632 = vld [vmem:[#allocation6 + $0x98] sm:$0xff]
    %v2633 = vld [vmem:[#allocation6 + $0xa0] sm:$0xff]
    %v2634 = vld [vmem:[#allocation6 + $0xa8] sm:$0xff]
    %v2635 = vld [vmem:[#allocation6 + $0xb0] sm:$0xff]
    %v2636 = vld [vmem:[#allocation6 + $0xb8] sm:$0xff]
    %v2637 = vld [vmem:[#allocation6 + $0xc0] sm:$0xff]
    %v2638 = vld [vmem:[#allocation6 + $0xc8] sm:$0xff]
    %v2639 = vld [vmem:[#allocation6 + $0xd0] sm:$0xff]
    %v2640 = vld [vmem:[#allocation6 + $0xd8] sm:$0xff]
    %v2641 = vld [vmem:[#allocation6 + $0xe0] sm:$0xff]
    %v2642 = vld [vmem:[#allocation6 + $0xe8] sm:$0xff]
    %v2643 = vld [vmem:[#allocation6 + $0xf0] sm:$0xff]
    %v2644 = vld [vmem:[#allocation6 + $0xf8] sm:$0xff]
    %v2645 = vld [vmem:[#allocation6 + $0x100] sm:$0xff]
    %v2646 = vld [vmem:[#allocation6 + $0x108] sm:$0xff]
    %v2647 = vld [vmem:[#allocation6 + $0x110] sm:$0xff]
    %v2648 = vld [vmem:[#allocation6 + $0x118] sm:$0xff]
    %v2649 = vld [vmem:[#allocation6 + $0x120] sm:$0xff]
    %v2650 = vld [vmem:[#allocation6 + $0x128] sm:$0xff]
    %v2651 = vld [vmem:[#allocation6 + $0x130] sm:$0xff]
    %v2652 = vld [vmem:[#allocation6 + $0x138] sm:$0xff]
    %v2653 = vld [vmem:[#allocation6 + $0x140] sm:$0xff]
    %v2654 = vld [vmem:[#allocation6 + $0x148] sm:$0xff]
    %v2655 = vld [vmem:[#allocation6 + $0x150] sm:$0xff]
    %v2656 = vld [vmem:[#allocation6 + $0x158] sm:$0xff]
    %v2657 = vld [vmem:[#allocation6 + $0x160] sm:$0xff]
    %v2658 = vld [vmem:[#allocation6 + $0x168] sm:$0xff]
    %v2659 = vld [vmem:[#allocation6 + $0x170] sm:$0xff]
    %v2660 = vld [vmem:[#allocation6 + $0x178] sm:$0xff]
    %v2661 = vld [vmem:[#allocation6 + $0x180] sm:$0xff]
    %v2662 = vld [vmem:[#allocation6 + $0x188] sm:$0xff]
    %v2663 = vld [vmem:[#allocation6 + $0x190] sm:$0xff]
    %v2664 = vld [vmem:[#allocation6 + $0x198] sm:$0xff]
    %v2665 = vld [vmem:[#allocation6 + $0x1a0] sm:$0xff]
    %v2666 = vld [vmem:[#allocation6 + $0x1a8] sm:$0xff]
    %v2667 = vld [vmem:[#allocation6 + $0x1b0] sm:$0xff]
    %v2668 = vld [vmem:[#allocation6 + $0x1b8] sm:$0xff]
    %v2669 = vld [vmem:[#allocation6 + $0x1c0] sm:$0xff]
    %v2670 = vld [vmem:[#allocation6 + $0x1c8] sm:$0xff]
    %v2671 = vld [vmem:[#allocation6 + $0x1d0] sm:$0xff]
    %v2672 = vld [vmem:[#allocation6 + $0x1d8] sm:$0xff]
    %v2673 = vld [vmem:[#allocation6 + $0x1e0] sm:$0xff]
    %v2674 = vld [vmem:[#allocation6 + $0x1e8] sm:$0xff]
    %v2675 = vld [vmem:[#allocation6 + $0x1f0] sm:$0xff]
    %v2676 = vld [vmem:[#allocation6 + $0x1f8] sm:$0xff]
    %v2677 = vld [vmem:[%s6] sm:$0x3]
    %v2679 = vlaneseq
    %v2680 = vshrl.u32 %v2679, 7
    %v2681 = vsub.s32 0, %v2680
    %v2682 = vrot.slane %v2677, %v2681
    %v2683 = vlaneseq
    %v2684 = vshrl.u32 %v2683, 7
    %v2685 = vsub.s32 1, %v2684
    %v2686 = vrot.slane %v2677, %v2685
    %v2753 = vunpack.c.l.b16 %v2613
    %v2754 = vunpack.c.h.b16 %v2613
    %v2755 = vunpack.c.l.b16 %v2614
    %v2756 = vunpack.c.h.b16 %v2614
    %v2757 = vunpack.c.l.b16 %v2615
    %v2758 = vunpack.c.h.b16 %v2615
    %v2759 = vunpack.c.l.b16 %v2616
    %v2760 = vunpack.c.h.b16 %v2616
    %v2761 = vunpack.c.l.b16 %v2617
    %v2762 = vunpack.c.h.b16 %v2617
    %v2763 = vunpack.c.l.b16 %v2618
    %v2764 = vunpack.c.h.b16 %v2618
    %v2765 = vunpack.c.l.b16 %v2619
    %v2766 = vunpack.c.h.b16 %v2619
    %v2767 = vunpack.c.l.b16 %v2620
    %v2768 = vunpack.c.h.b16 %v2620
    %v2769 = vunpack.c.l.b16 %v2621
    %v2770 = vunpack.c.h.b16 %v2621
    %v2771 = vunpack.c.l.b16 %v2622
    %v2772 = vunpack.c.h.b16 %v2622
    %v2773 = vunpack.c.l.b16 %v2623
    %v2774 = vunpack.c.h.b16 %v2623
    %v2775 = vunpack.c.l.b16 %v2624
    %v2776 = vunpack.c.h.b16 %v2624
    %v2777 = vunpack.c.l.b16 %v2625
    %v2778 = vunpack.c.h.b16 %v2625
    %v2779 = vunpack.c.l.b16 %v2626
    %v2780 = vunpack.c.h.b16 %v2626
    %v2781 = vunpack.c.l.b16 %v2627
    %v2782 = vunpack.c.h.b16 %v2627
    %v2783 = vunpack.c.l.b16 %v2628
    %v2784 = vunpack.c.h.b16 %v2628
    %v2785 = vunpack.c.l.b16 %v2629
    %v2786 = vunpack.c.h.b16 %v2629
    %v2787 = vunpack.c.l.b16 %v2630
    %v2788 = vunpack.c.h.b16 %v2630
    %v2789 = vunpack.c.l.b16 %v2631
    %v2790 = vunpack.c.h.b16 %v2631
    %v2791 = vunpack.c.l.b16 %v2632
    %v2792 = vunpack.c.h.b16 %v2632
    %v2793 = vunpack.c.l.b16 %v2633
    %v2794 = vunpack.c.h.b16 %v2633
    %v2795 = vunpack.c.l.b16 %v2634
    %v2796 = vunpack.c.h.b16 %v2634
    %v2797 = vunpack.c.l.b16 %v2635
    %v2798 = vunpack.c.h.b16 %v2635
    %v2799 = vunpack.c.l.b16 %v2636
    %v2800 = vunpack.c.h.b16 %v2636
    %v2801 = vunpack.c.l.b16 %v2637
    %v2802 = vunpack.c.h.b16 %v2637
    %v2803 = vunpack.c.l.b16 %v2638
    %v2804 = vunpack.c.h.b16 %v2638
    %v2805 = vunpack.c.l.b16 %v2639
    %v2806 = vunpack.c.h.b16 %v2639
    %v2807 = vunpack.c.l.b16 %v2640
    %v2808 = vunpack.c.h.b16 %v2640
    %v2809 = vunpack.c.l.b16 %v2641
    %v2810 = vunpack.c.h.b16 %v2641
    %v2811 = vunpack.c.l.b16 %v2642
    %v2812 = vunpack.c.h.b16 %v2642
    %v2813 = vunpack.c.l.b16 %v2643
    %v2814 = vunpack.c.h.b16 %v2643
    %v2815 = vunpack.c.l.b16 %v2644
    %v2816 = vunpack.c.h.b16 %v2644
    %v2817 = vunpack.c.l.b16 %v2645
    %v2818 = vunpack.c.h.b16 %v2645
    %v2819 = vunpack.c.l.b16 %v2646
    %v2820 = vunpack.c.h.b16 %v2646
    %v2821 = vunpack.c.l.b16 %v2647
    %v2822 = vunpack.c.h.b16 %v2647
    %v2823 = vunpack.c.l.b16 %v2648
    %v2824 = vunpack.c.h.b16 %v2648
    %v2825 = vunpack.c.l.b16 %v2649
    %v2826 = vunpack.c.h.b16 %v2649
    %v2827 = vunpack.c.l.b16 %v2650
    %v2828 = vunpack.c.h.b16 %v2650
    %v2829 = vunpack.c.l.b16 %v2651
    %v2830 = vunpack.c.h.b16 %v2651
    %v2831 = vunpack.c.l.b16 %v2652
    %v2832 = vunpack.c.h.b16 %v2652
    %v2833 = vunpack.c.l.b16 %v2653
    %v2834 = vunpack.c.h.b16 %v2653
    %v2835 = vunpack.c.l.b16 %v2654
    %v2836 = vunpack.c.h.b16 %v2654
    %v2837 = vunpack.c.l.b16 %v2655
    %v2838 = vunpack.c.h.b16 %v2655
    %v2839 = vunpack.c.l.b16 %v2656
    %v2840 = vunpack.c.h.b16 %v2656
    %v2841 = vunpack.c.l.b16 %v2657
    %v2842 = vunpack.c.h.b16 %v2657
    %v2843 = vunpack.c.l.b16 %v2658
    %v2844 = vunpack.c.h.b16 %v2658
    %v2845 = vunpack.c.l.b16 %v2659
    %v2846 = vunpack.c.h.b16 %v2659
    %v2847 = vunpack.c.l.b16 %v2660
    %v2848 = vunpack.c.h.b16 %v2660
    %v2849 = vunpack.c.l.b16 %v2661
    %v2850 = vunpack.c.h.b16 %v2661
    %v2851 = vunpack.c.l.b16 %v2662
    %v2852 = vunpack.c.h.b16 %v2662
    %v2853 = vunpack.c.l.b16 %v2663
    %v2854 = vunpack.c.h.b16 %v2663
    %v2855 = vunpack.c.l.b16 %v2664
    %v2856 = vunpack.c.h.b16 %v2664
    %v2857 = vunpack.c.l.b16 %v2665
    %v2858 = vunpack.c.h.b16 %v2665
    %v2859 = vunpack.c.l.b16 %v2666
    %v2860 = vunpack.c.h.b16 %v2666
    %v2861 = vunpack.c.l.b16 %v2667
    %v2862 = vunpack.c.h.b16 %v2667
    %v2863 = vunpack.c.l.b16 %v2668
    %v2864 = vunpack.c.h.b16 %v2668
    %v2865 = vunpack.c.l.b16 %v2669
    %v2866 = vunpack.c.h.b16 %v2669
    %v2867 = vunpack.c.l.b16 %v2670
    %v2868 = vunpack.c.h.b16 %v2670
    %v2869 = vunpack.c.l.b16 %v2671
    %v2870 = vunpack.c.h.b16 %v2671
    %v2871 = vunpack.c.l.b16 %v2672
    %v2872 = vunpack.c.h.b16 %v2672
    %v2873 = vunpack.c.l.b16 %v2673
    %v2874 = vunpack.c.h.b16 %v2673
    %v2875 = vunpack.c.l.b16 %v2674
    %v2876 = vunpack.c.h.b16 %v2674
    %v2877 = vunpack.c.l.b16 %v2675
    %v2878 = vunpack.c.h.b16 %v2675
    %v2879 = vunpack.c.l.b16 %v2676
    %v2880 = vunpack.c.h.b16 %v2676
    %v2881 = vpack.c.b16 %v2755, %v2753
    %v2882 = vpack.c.b16 %v2756, %v2754
    %v2883 = vpack.c.b16 %v2759, %v2757
    %v2884 = vpack.c.b16 %v2760, %v2758
    %v2885 = vpack.c.b16 %v2763, %v2761
    %v2886 = vpack.c.b16 %v2764, %v2762
    %v2887 = vpack.c.b16 %v2767, %v2765
    %v2888 = vpack.c.b16 %v2768, %v2766
    %v2889 = vpack.c.b16 %v2771, %v2769
    %v2890 = vpack.c.b16 %v2772, %v2770
    %v2891 = vpack.c.b16 %v2775, %v2773
    %v2892 = vpack.c.b16 %v2776, %v2774
    %v2893 = vpack.c.b16 %v2779, %v2777
    %v2894 = vpack.c.b16 %v2780, %v2778
    %v2895 = vpack.c.b16 %v2783, %v2781
    %v2896 = vpack.c.b16 %v2784, %v2782
    %v2897 = vpack.c.b16 %v2787, %v2785
    %v2898 = vpack.c.b16 %v2788, %v2786
    %v2899 = vpack.c.b16 %v2791, %v2789
    %v2900 = vpack.c.b16 %v2792, %v2790
    %v2901 = vpack.c.b16 %v2795, %v2793
    %v2902 = vpack.c.b16 %v2796, %v2794
    %v2903 = vpack.c.b16 %v2799, %v2797
    %v2904 = vpack.c.b16 %v2800, %v2798
    %v2905 = vpack.c.b16 %v2803, %v2801
    %v2906 = vpack.c.b16 %v2804, %v2802
    %v2907 = vpack.c.b16 %v2807, %v2805
    %v2908 = vpack.c.b16 %v2808, %v2806
    %v2909 = vpack.c.b16 %v2811, %v2809
    %v2910 = vpack.c.b16 %v2812, %v2810
    %v2911 = vpack.c.b16 %v2815, %v2813
    %v2912 = vpack.c.b16 %v2816, %v2814
    %v2913 = vpack.c.b16 %v2819, %v2817
    %v2914 = vpack.c.b16 %v2820, %v2818
    %v2915 = vpack.c.b16 %v2823, %v2821
    %v2916 = vpack.c.b16 %v2824, %v2822
    %v2917 = vpack.c.b16 %v2827, %v2825
    %v2918 = vpack.c.b16 %v2828, %v2826
    %v2919 = vpack.c.b16 %v2831, %v2829
    %v2920 = vpack.c.b16 %v2832, %v2830
    %v2921 = vpack.c.b16 %v2835, %v2833
    %v2922 = vpack.c.b16 %v2836, %v2834
    %v2923 = vpack.c.b16 %v2839, %v2837
    %v2924 = vpack.c.b16 %v2840, %v2838
    %v2925 = vpack.c.b16 %v2843, %v2841
    %v2926 = vpack.c.b16 %v2844, %v2842
    %v2927 = vpack.c.b16 %v2847, %v2845
    %v2928 = vpack.c.b16 %v2848, %v2846
    %v2929 = vpack.c.b16 %v2851, %v2849
    %v2930 = vpack.c.b16 %v2852, %v2850
    %v2931 = vpack.c.b16 %v2855, %v2853
    %v2932 = vpack.c.b16 %v2856, %v2854
    %v2933 = vpack.c.b16 %v2859, %v2857
    %v2934 = vpack.c.b16 %v2860, %v2858
    %v2935 = vpack.c.b16 %v2863, %v2861
    %v2936 = vpack.c.b16 %v2864, %v2862
    %v2937 = vpack.c.b16 %v2867, %v2865
    %v2938 = vpack.c.b16 %v2868, %v2866
    %v2939 = vpack.c.b16 %v2871, %v2869
    %v2940 = vpack.c.b16 %v2872, %v2870
    %v2941 = vpack.c.b16 %v2875, %v2873
    %v2942 = vpack.c.b16 %v2876, %v2874
    %v2943 = vpack.c.b16 %v2879, %v2877
    %v2944 = vpack.c.b16 %v2880, %v2878
    %3009 = vmatprep.subr.bf16.mxu0 %v2882
    %3010 = vmatpush1.bf16.msra.mxu0 %v2881
    %3011 = vmatprep.subr.bf16.mxu0 %v2884
    %3012 = vmatpush1.bf16.msra.mxu0 %v2883
    %3013 = vmatprep.subr.bf16.mxu0 %v2886
    %3014 = vmatpush1.bf16.msra.mxu0 %v2885
    %3015 = vmatprep.subr.bf16.mxu0 %v2888
    %3016 = vmatpush1.bf16.msra.mxu0 %v2887
    %3017 = vmatprep.subr.bf16.mxu0 %v2890
    %3018 = vmatpush1.bf16.msra.mxu0 %v2889
    %3019 = vmatprep.subr.bf16.mxu0 %v2892
    %3020 = vmatpush1.bf16.msra.mxu0 %v2891
    %3021 = vmatprep.subr.bf16.mxu0 %v2894
    %3022 = vmatpush1.bf16.msra.mxu0 %v2893
    %3023 = vmatprep.subr.bf16.mxu0 %v2896
    %3024 = vmatpush1.bf16.msra.mxu0 %v2895
    %3025 = vmatprep.subr.bf16.mxu0 %v2898
    %3026 = vmatpush1.bf16.msra.mxu0 %v2897
    %3027 = vmatprep.subr.bf16.mxu0 %v2900
    %3028 = vmatpush1.bf16.msra.mxu0 %v2899
    %3029 = vmatprep.subr.bf16.mxu0 %v2902
    %3030 = vmatpush1.bf16.msra.mxu0 %v2901
    %3031 = vmatprep.subr.bf16.mxu0 %v2904
    %3032 = vmatpush1.bf16.msra.mxu0 %v2903
    %3033 = vmatprep.subr.bf16.mxu0 %v2906
    %3034 = vmatpush1.bf16.msra.mxu0 %v2905
    %3035 = vmatprep.subr.bf16.mxu0 %v2908
    %3036 = vmatpush1.bf16.msra.mxu0 %v2907
    %3037 = vmatprep.subr.bf16.mxu0 %v2910
    %3038 = vmatpush1.bf16.msra.mxu0 %v2909
    %3039 = vmatprep.subr.bf16.mxu0 %v2912
    %3040 = vmatpush1.bf16.msra.mxu0 %v2911
    %3041 = vmatprep.mubr.bf16.mxu0 %v2610
    %3042 = vmatmul.mubr.bf16.gmra.mrb[0].mxu0 %v2609
    %v3043 = vpop.f32.mrb[0].mxu0
    %v3044 = vadd.f32 %v2682, %v3043
    %v3045 = vpop.f32.mrb[0].mxu0
    %v3046 = vadd.f32 %v2686, %v3045
    %v3047 = vpop.f32.mrb[0].mxu0
    %v3048 = vpop.f32.mrb[0].mxu0
    %3049 = vdwg.mxu0
    %3050 = vmatprep.subr.bf16.mxu0 %v2914
    %3051 = vmatpush1.bf16.msra.mxu0 %v2913
    %3052 = vmatprep.subr.bf16.mxu0 %v2916
    %3053 = vmatpush1.bf16.msra.mxu0 %v2915
    %3054 = vmatprep.subr.bf16.mxu0 %v2918
    %3055 = vmatpush1.bf16.msra.mxu0 %v2917
    %3056 = vmatprep.subr.bf16.mxu0 %v2920
    %3057 = vmatpush1.bf16.msra.mxu0 %v2919
    %3058 = vmatprep.subr.bf16.mxu0 %v2922
    %3059 = vmatpush1.bf16.msra.mxu0 %v2921
    %3060 = vmatprep.subr.bf16.mxu0 %v2924
    %3061 = vmatpush1.bf16.msra.mxu0 %v2923
    %3062 = vmatprep.subr.bf16.mxu0 %v2926
    %3063 = vmatpush1.bf16.msra.mxu0 %v2925
    %3064 = vmatprep.subr.bf16.mxu0 %v2928
    %3065 = vmatpush1.bf16.msra.mxu0 %v2927
    %3066 = vmatprep.subr.bf16.mxu0 %v2930
    %3067 = vmatpush1.bf16.msra.mxu0 %v2929
    %3068 = vmatprep.subr.bf16.mxu0 %v2932
    %3069 = vmatpush1.bf16.msra.mxu0 %v2931
    %3070 = vmatprep.subr.bf16.mxu0 %v2934
    %3071 = vmatpush1.bf16.msra.mxu0 %v2933
    %3072 = vmatprep.subr.bf16.mxu0 %v2936
    %3073 = vmatpush1.bf16.msra.mxu0 %v2935
    %3074 = vmatprep.subr.bf16.mxu0 %v2938
    %3075 = vmatpush1.bf16.msra.mxu0 %v2937
    %3076 = vmatprep.subr.bf16.mxu0 %v2940
    %3077 = vmatpush1.bf16.msra.mxu0 %v2939
    %3078 = vmatprep.subr.bf16.mxu0 %v2942
    %3079 = vmatpush1.bf16.msra.mxu0 %v2941
    %3080 = vmatprep.subr.bf16.mxu0 %v2944
    %3081 = vmatpush1.bf16.msra.mxu0 %v2943
    %3082 = vmatprep.mubr.bf16.mxu0 %v2612
    %3083 = vmatmul.mubr.bf16.gmra.mrb[0].mxu0 %v2611
    %v3084 = vpop.f32.mrb[0].mxu0
    %v3085 = vadd.f32 %v3044, %v3084
    %v3086 = vpop.f32.mrb[0].mxu0
    %v3087 = vadd.f32 %v3046, %v3086
    %v3088 = vpop.f32.mrb[0].mxu0
    %v3089 = vpop.f32.mrb[0].mxu0
    %3090 = vdwg.mxu0
    %vm3091 = vcmp.gt.f32.partialorder %v3085, 0.0
    %vm3092 = vcmp.gt.f32.partialorder %v3087, 0.0
    %v3093 = vmul.f32 %v3085, 0.01
    %v3094 = vmul.f32 %v3087, 0.01
    %v3095 = vsel %vm3091, %v3085, %v3093
    %v3096 = vsel %vm3092, %v3087, %v3094
    %v3097 = vpack.c.bf16 %v3095, %v3095
    %v3098 = vpack.c.bf16 %v3096, %v3096
    %v3099 = vld [vmem:[#allocation7] sm:$0xf]
    %v3100 = vld [vmem:[#allocation7 + $0x4] sm:$0xf]
    %v3101 = vld [vmem:[#allocation7 + $0x8] sm:$0xf]
    %v3102 = vld [vmem:[#allocation7 + $0xc] sm:$0xf]
    %v3103 = vld [vmem:[#allocation7 + $0x10] sm:$0xf]
    %v3104 = vld [vmem:[#allocation7 + $0x14] sm:$0xf]
    %v3105 = vld [vmem:[#allocation7 + $0x18] sm:$0xf]
    %v3106 = vld [vmem:[#allocation7 + $0x1c] sm:$0xf]
    %v3107 = vld [vmem:[#allocation7 + $0x20] sm:$0xf]
    %v3108 = vld [vmem:[#allocation7 + $0x24] sm:$0xf]
    %v3109 = vld [vmem:[#allocation7 + $0x28] sm:$0xf]
    %v3110 = vld [vmem:[#allocation7 + $0x2c] sm:$0xf]
    %v3111 = vld [vmem:[#allocation7 + $0x30] sm:$0xf]
    %v3112 = vld [vmem:[#allocation7 + $0x34] sm:$0xf]
    %v3113 = vld [vmem:[#allocation7 + $0x38] sm:$0xf]
    %v3114 = vld [vmem:[#allocation7 + $0x3c] sm:$0xf]
    %v3115 = vld [vmem:[#allocation7 + $0x40] sm:$0xf]
    %v3116 = vld [vmem:[#allocation7 + $0x44] sm:$0xf]
    %v3117 = vld [vmem:[#allocation7 + $0x48] sm:$0xf]
    %v3118 = vld [vmem:[#allocation7 + $0x4c] sm:$0xf]
    %v3119 = vld [vmem:[#allocation7 + $0x50] sm:$0xf]
    %v3120 = vld [vmem:[#allocation7 + $0x54] sm:$0xf]
    %v3121 = vld [vmem:[#allocation7 + $0x58] sm:$0xf]
    %v3122 = vld [vmem:[#allocation7 + $0x5c] sm:$0xf]
    %v3123 = vld [vmem:[#allocation7 + $0x60] sm:$0xf]
    %v3124 = vld [vmem:[#allocation7 + $0x64] sm:$0xf]
    %v3125 = vld [vmem:[#allocation7 + $0x68] sm:$0xf]
    %v3126 = vld [vmem:[#allocation7 + $0x6c] sm:$0xf]
    %v3127 = vld [vmem:[#allocation7 + $0x70] sm:$0xf]
    %v3128 = vld [vmem:[#allocation7 + $0x74] sm:$0xf]
    %v3129 = vld [vmem:[#allocation7 + $0x78] sm:$0xf]
    %v3130 = vld [vmem:[#allocation7 + $0x7c] sm:$0xf]
    %v3131 = vld [vmem:[%s8] sm:$0x1]
    %v3133 = vlaneseq
    %v3134 = vshrl.u32 %v3133, 7
    %v3135 = vsub.s32 0, %v3134
    %v3136 = vrot.slane %v3131, %v3135
    %v3170 = vunpack.c.l.b16 %v3099
    %v3171 = vunpack.c.l.b16 %v3100
    %v3172 = vunpack.c.l.b16 %v3101
    %v3173 = vunpack.c.l.b16 %v3102
    %v3174 = vunpack.c.l.b16 %v3103
    %v3175 = vunpack.c.l.b16 %v3104
    %v3176 = vunpack.c.l.b16 %v3105
    %v3177 = vunpack.c.l.b16 %v3106
    %v3178 = vunpack.c.l.b16 %v3107
    %v3179 = vunpack.c.l.b16 %v3108
    %v3180 = vunpack.c.l.b16 %v3109
    %v3181 = vunpack.c.l.b16 %v3110
    %v3182 = vunpack.c.l.b16 %v3111
    %v3183 = vunpack.c.l.b16 %v3112
    %v3184 = vunpack.c.l.b16 %v3113
    %v3185 = vunpack.c.l.b16 %v3114
    %v3186 = vunpack.c.l.b16 %v3115
    %v3187 = vunpack.c.l.b16 %v3116
    %v3188 = vunpack.c.l.b16 %v3117
    %v3189 = vunpack.c.l.b16 %v3118
    %v3190 = vunpack.c.l.b16 %v3119
    %v3191 = vunpack.c.l.b16 %v3120
    %v3192 = vunpack.c.l.b16 %v3121
    %v3193 = vunpack.c.l.b16 %v3122
    %v3194 = vunpack.c.l.b16 %v3123
    %v3195 = vunpack.c.l.b16 %v3124
    %v3196 = vunpack.c.l.b16 %v3125
    %v3197 = vunpack.c.l.b16 %v3126
    %v3198 = vunpack.c.l.b16 %v3127
    %v3199 = vunpack.c.l.b16 %v3128
    %v3200 = vunpack.c.l.b16 %v3129
    %v3201 = vunpack.c.l.b16 %v3130
    %v3202 = vpack.c.b16 %v3171, %v3170
    %v3203 = vpack.c.b16 %v3173, %v3172
    %v3204 = vpack.c.b16 %v3175, %v3174
    %v3205 = vpack.c.b16 %v3177, %v3176
    %v3206 = vpack.c.b16 %v3179, %v3178
    %v3207 = vpack.c.b16 %v3181, %v3180
    %v3208 = vpack.c.b16 %v3183, %v3182
    %v3209 = vpack.c.b16 %v3185, %v3184
    %v3210 = vpack.c.b16 %v3187, %v3186
    %v3211 = vpack.c.b16 %v3189, %v3188
    %v3212 = vpack.c.b16 %v3191, %v3190
    %v3213 = vpack.c.b16 %v3193, %v3192
    %v3214 = vpack.c.b16 %v3195, %v3194
    %v3215 = vpack.c.b16 %v3197, %v3196
    %v3216 = vpack.c.b16 %v3199, %v3198
    %v3217 = vpack.c.b16 %v3201, %v3200
    %3234 = vmatprep.subr.bf16.mxu0 0
    %3235 = vmatpush1.bf16.msra.mxu0 %v3202
    %3236 = vmatprep.subr.bf16.mxu0 0
    %3237 = vmatpush1.bf16.msra.mxu0 %v3203
    %3238 = vmatprep.subr.bf16.mxu0 0
    %3239 = vmatpush1.bf16.msra.mxu0 %v3204
    %3240 = vmatprep.subr.bf16.mxu0 0
    %3241 = vmatpush1.bf16.msra.mxu0 %v3205
    %3242 = vmatprep.subr.bf16.mxu0 0
    %3243 = vmatpush1.bf16.msra.mxu0 %v3206
    %3244 = vmatprep.subr.bf16.mxu0 0
    %3245 = vmatpush1.bf16.msra.mxu0 %v3207
    %3246 = vmatprep.subr.bf16.mxu0 0
    %3247 = vmatpush1.bf16.msra.mxu0 %v3208
    %3248 = vmatprep.subr.bf16.mxu0 0
    %3249 = vmatpush1.bf16.msra.mxu0 %v3209
    %3250 = vmatprep.subr.bf16.mxu0 0
    %3251 = vmatpush1.bf16.msra.mxu0 %v3210
    %3252 = vmatprep.subr.bf16.mxu0 0
    %3253 = vmatpush1.bf16.msra.mxu0 %v3211
    %3254 = vmatprep.subr.bf16.mxu0 0
    %3255 = vmatpush1.bf16.msra.mxu0 %v3212
    %3256 = vmatprep.subr.bf16.mxu0 0
    %3257 = vmatpush1.bf16.msra.mxu0 %v3213
    %3258 = vmatprep.subr.bf16.mxu0 0
    %3259 = vmatpush1.bf16.msra.mxu0 %v3214
    %3260 = vmatprep.subr.bf16.mxu0 0
    %3261 = vmatpush1.bf16.msra.mxu0 %v3215
    %3262 = vmatprep.subr.bf16.mxu0 0
    %3263 = vmatpush1.bf16.msra.mxu0 %v3216
    %3264 = vmatprep.subr.bf16.mxu0 0
    %3265 = vmatpush1.bf16.msra.mxu0 %v3217
    %3266 = vmatprep.mubr.bf16.mxu0 %v3098
    %3267 = vmatmul.mubr.bf16.gmra.mrb[0].mxu0 %v3097
    %v3268 = vpop.f32.mrb[0].mxu0
    %v3269 = vadd.f32 %v3136, %v3268
    %v3270 = vpop.f32.mrb[0].mxu0
    %v3271 = vpop.f32.mrb[0].mxu0
    %v3272 = vpop.f32.mrb[0].mxu0
    %3273 = vdwg.mxu0
    %3274 = vst [vmem:[%s9] sm:$0xff] %v3269
    // Predicated region
    $region54: #{encoder_apply.1} parent=1 // pred_check
      _
    $region55: #{encoder_apply.1} parent=1 // pred_check_branch
      %3276 = sbr.rel (0) target = $region57
    $region56: #{encoder_apply.1} parent=1 // pred_region
      _
    $region57: #{encoder_apply.1} parent=1 // pred_fallthru
      _
    // Predicated region
    $region58: #{encoder_apply.1} parent=1 // pred_check
      _
    $region59: #{encoder_apply.1} parent=1 // pred_check_branch
      %3278 = sbr.rel (0) target = $region61
    $region60: #{encoder_apply.1} parent=1 // pred_region
      _
    $region61: #{encoder_apply.1} parent=1 // pred_fallthru
      _
    %3279 = vsyncpa [#allocation3], 1
    %3280 = vsyncpa [#allocation5], 1
    %3281 = vsyncpa [#allocation8], 1

</llo_original>
